<compile_context>
chip_gen: v7x
topology: tpu7x:2x2x1
jax: 0.10.0
libtpu: 0.0.40
codegen_flags: <defaults>
</compile_context>

<pallas_src>
import functools

import numpy as np
import jax
import jax.numpy as jnp
from jax.experimental import pallas as pl
from jax.experimental.pallas import tpu as pltpu


_NEG_INIT = -1e30   # init for running maxima (finite; exp() underflows cleanly to 0)
_NEG_FILL = -1e9    # lane-padding fill for logits (acts like -inf after the temp scale)


def _round_up(x, m):
    return (x + m - 1) // m * m


# ----------------------------------------------------------------------------------
# Kernel
# ----------------------------------------------------------------------------------
def _dino_loss_kernel(params_ref, student_ref, teacher_ref, center_ref,
                      loss_ref, csum_ref,
                      m_t_ref, l_t_ref, a_sum_ref, a_diag_ref,
                      m_s_ref, l_s_ref, *, true_batch):
    """One grid step: (ncrops, TB, DT) student / (2, TB, DT) teacher slab."""
    ncrops, row_tile, lane_tile = student_ref.shape
    i = pl.program_id(0)            # batch-row tile ("parallel")
    d = pl.program_id(1)            # out_dim lane tile ("arbitrary" online reduction)
    nd = pl.num_programs(1)

    inv_s_temp = params_ref[0]
    inv_t_temp = params_ref[1]
    inv_batch = params_ref[2]       # 1 / B                 (loss.mean over rows)
    inv_n_terms = params_ref[3]     # 1 / (2*(ncrops-1))

    # ---- reset the per-row-tile online-softmax state at the start of each lane sweep
    @pl.when(d == 0)
    def _reset():
        m_t_ref[...] = jnp.full(m_t_ref.shape, _NEG_INIT, jnp.float32)
        l_t_ref[...] = jnp.zeros(l_t_ref.shape, jnp.float32)
        a_sum_ref[...] = jnp.zeros(a_sum_ref.shape, jnp.float32)
        a_diag_ref[...] = jnp.zeros(a_diag_ref.shape, jnp.float32)
        m_s_ref[...] = jnp.full(m_s_ref.shape, _NEG_INIT, jnp.float32)
        l_s_ref[...] = jnp.zeros(l_s_ref.shape, jnp.float32)

    teacher = teacher_ref[...].astype(jnp.float32)                        # (2, TB, DT)
    center = center_ref[...].astype(jnp.float32).reshape(1, 1, lane_tile)  # (1, 1, DT)

    # ---- teacher: online softmax statistics over the lane axis ---------------------
    t_logits = (teacher - center) * inv_t_temp                             # (2, TB, DT)
    m_old = m_t_ref[...]                                                   # (2, TB, 1)
    m_new = jnp.maximum(m_old, jnp.max(t_logits, axis=-1, keepdims=True))
    alpha = jnp.exp(m_old - m_new)                                         # rescale
    e_t = jnp.exp(t_logits - m_new)                                        # (2, TB, DT)
    m_t_ref[...] = m_new
    l_t_ref[...] = alpha * l_t_ref[...] + jnp.sum(e_t, axis=-1, keepdims=True)

    # ---- student: one crop slab at a time (bounded live VMEM, per review) ----------
    # Fully unrolled static loop: each iteration keeps only one (TB, DT) f32 slab live
    # and folds it into (2, TB, 1) accumulators, so the footprint is independent of
    # ncrops (unrolled short loops also keep LLO scheduling visibility).
    crop_iota = jax.lax.broadcasted_iota(jnp.int32, (2, 1, 1), 0)          # [[0],[1]]
    a_sum_part = jnp.zeros((2, row_tile, 1), jnp.float32)
    a_diag_part = jnp.zeros((2, row_tile, 1), jnp.float32)
    for v in range(ncrops):
        s_blk = student_ref[v].astype(jnp.float32) * inv_s_temp            # (TB, DT)
        # online log-sum-exp for crop v
        ms_old = m_s_ref[v]                                                # (TB, 1)
        ms_new = jnp.maximum(ms_old, jnp.max(s_blk, axis=-1, keepdims=True))
        l_s_ref[v] = (jnp.exp(ms_old - ms_new) * l_s_ref[v]
                      + jnp.sum(jnp.exp(s_blk - ms_new), axis=-1, keepdims=True))
        m_s_ref[v] = ms_new
        # unnormalised cross terms against both teacher views
        es = jnp.sum(e_t * s_blk[None], axis=-1, keepdims=True)            # (2, TB, 1)
        a_sum_part = a_sum_part + es
        if v < 2:                                                          # diagonal v == iq
            a_diag_part = a_diag_part + jnp.where(crop_iota == v, es, 0.0)
    a_sum_ref[...] = alpha * a_sum_ref[...] + a_sum_part
    a_diag_ref[...] = alpha * a_diag_ref[...] + a_diag_part

    # ---- teacher column sum partial for the EMA center (VPU add + sublane reduce) --
    col_sum = jnp.sum(teacher[0] + teacher[1], axis=0, keepdims=True)      # (1, DT)
    csum_ref[...] = col_sum.reshape(1, 1, lane_tile)

    # ---- finalize this row tile's loss after the last lane tile ---------------------
    @pl.when(d == nd - 1)
    def _finalize():
        m_plus = m_s_ref[...] + jnp.log(l_s_ref[...])                      # (ncrops, TB, 1)
        c_all = jnp.sum(m_plus, axis=0)                                    # (TB, 1)
        # exact divide (review: approx reciprocal loosened the loss tolerance)
        cross = (a_sum_ref[...] - a_diag_ref[...]) / l_t_ref[...]          # (2, TB, 1)
        per_row = (2.0 * c_all - m_plus[0] - m_plus[1]
                   - cross[0] - cross[1])                                  # (TB, 1)
        row_ids = i * row_tile + jax.lax.broadcasted_iota(jnp.int32, (row_tile, 1), 0)
        per_row = jnp.where(row_ids < true_batch, per_row, 0.0)            # mask padding
        tile_loss = jnp.sum(per_row) * inv_batch * inv_n_terms
        loss_ref[...] = jnp.full(loss_ref.shape, tile_loss, dtype=jnp.float32)


# ----------------------------------------------------------------------------------
# VMEM budgeting + tile selection (generation-aware)
# ----------------------------------------------------------------------------------
def _vmem_caps():
    """(tile-planning budget, scoped vmem_limit) derived from the chip's VMEM size."""
    cap = 64 * 1024 * 1024                       # conservative default (v7x per-TC VMEM)
    try:
        info_cap = int(pltpu.get_tpu_info().vmem_capacity_bytes)
        if info_cap > 0:
            cap = info_cap
    except Exception:
        pass
    # ~25% headroom on v7x (64 MiB -> 48 MiB limit), ~100 MiB on 128 MiB v5e/v6e parts.
    vmem_limit = max(32 * 1024 * 1024, min(int(cap * 0.78), cap - 16 * 1024 * 1024))
    tile_budget = max(24 * 1024 * 1024, int(cap * 0.60))
    return tile_budget, vmem_limit


def _choose_tiles(batch, ncrops, out_dim, itemsize, budget):
    """Pick (row_tile, lane_tile) so the per-step working set fits the VMEM budget.

    Accounts for double-buffered native-dtype input tiles, ~9 f32 working slabs the
    body materialises (teacher f32 / logits / exp + per-crop student temporaries), the
    per-row-tile online-softmax scratch, and the resident output blocks.
    """
    row_step = 32 if itemsize == 1 else (16 if itemsize == 2 else 8)   # packed dtypes
    d_full = _round_up(out_dim, 128)
    cell_bytes = 2 * (ncrops + 2) * itemsize + 9 * 4

    def fits(tb, dt):
        stats = (8 + 2 * ncrops) * tb * 128 * 4        # (.., TB, 1) f32 scratch (lane pad)
        resident_out = 8 * 128 * 4 + 2 * 8 * dt * 4    # loss block + buffered csum block
        center = 2 * dt * 4
        slack = 2 * 1024 * 1024                        # compiler-internal scratch headroom
        return tb * dt * cell_bytes + stats + resident_out + center + slack <= budget

    tb_hi = max(row_step, _round_up(min(batch, 1024), row_step))
    # 1) keep the whole lane dim resident if it fits (single-pass softmax)
    tb = tb_hi
    while tb >= row_step:
        if fits(tb, d_full):
            return tb, d_full
        tb -= row_step
    # 2) otherwise tile out_dim: largest 128-multiple lane tile, then grow the row tile
    dt = d_full
    while dt > 128 and not fits(row_step, dt):
        dt = max(128, (dt // 2) // 128 * 128)
    tb = tb_hi
    while tb > row_step and not fits(tb, dt):
        tb -= row_step
    return tb, dt


# ----------------------------------------------------------------------------------
# Wrapper
# ----------------------------------------------------------------------------------
def dino_loss(student_output, teacher_output, center, *,
              ncrops, student_temp, teacher_temp, center_momentum,
              row_tile=None, lane_tile=None, activation_dtype=None):
    """Fused DINO loss forward. Returns (scalar loss, updated center of shape (1, D))."""
    if activation_dtype is not None:      # e.g. jnp.bfloat16 on HBM-bound v5e/v6e
        student_output = student_output.astype(activation_dtype)
        teacher_output = teacher_output.astype(activation_dtype)

    n_student_rows, out_dim = student_output.shape
    n_teacher_rows = teacher_output.shape[0]
    assert teacher_output.shape[1] == out_dim
    assert n_teacher_rows % 2 == 0
    batch = n_teacher_rows // 2
    assert n_student_rows == ncrops * batch
    assert ncrops >= 2

    itemsize = jnp.dtype(student_output.dtype).itemsize
    tile_budget, vmem_limit = _vmem_caps()
    tb_auto, dt_auto = _choose_tiles(batch, ncrops, out_dim, itemsize, tile_budget)
    tb = int(row_tile) if row_tile is not None else tb_auto
    dt = int(lane_tile) if lane_tile is not None else dt_auto
    assert tb % 8 == 0 and dt % 128 == 0

    b_pad = _round_up(batch, tb)
    d_pad = _round_up(out_dim, dt)
    nr = b_pad // tb
    nd = d_pad // dt

    center_f32 = jnp.asarray(center, jnp.float32).reshape(1, out_dim)
    student3 = student_output.reshape(ncrops, batch, out_dim)
    teacher3 = teacher_output.reshape(2, batch, out_dim)
    center_p = center_f32

    if d_pad != out_dim:
        pad = d_pad - out_dim
        # padded logit columns behave like -inf after the temperature scale
        student3 = jnp.pad(student3, ((0, 0), (0, 0), (0, pad)), constant_values=_NEG_FILL)
        teacher3 = jnp.pad(teacher3, ((0, 0), (0, 0), (0, pad)), constant_values=_NEG_FILL)
        center_p = jnp.pad(center_p, ((0, 0), (0, pad)))
    if b_pad != batch:
        pad = b_pad - batch
        # padded rows are masked out of the loss and add zero to the column sums
        student3 = jnp.pad(student3, ((0, 0), (0, pad), (0, 0)))
        teacher3 = jnp.pad(teacher3, ((0, 0), (0, pad), (0, 0)))

    params = jnp.array(
        [1.0 / student_temp,
         1.0 / teacher_temp,
         1.0 / batch,
         1.0 / (2 * (ncrops - 1))], dtype=jnp.float32)

    n_cells = (ncrops + 2) * b_pad * d_pad
    cost = pl.CostEstimate(
        flops=8 * n_cells,
        transcendentals=n_cells,
        bytes_accessed=(student3.size * student3.dtype.itemsize
                        + teacher3.size * teacher3.dtype.itemsize
                        + center_p.size * 4
                        + (nr * nd * dt + nr * 8 * 128) * 4))

    kernel = functools.partial(_dino_loss_kernel, true_batch=batch)
    loss_parts, csum_parts = pl.pallas_call(
        kernel,
        out_shape=(
            jax.ShapeDtypeStruct((nr, 8, 128), jnp.float32),        # per-row-tile loss partials
            jax.ShapeDtypeStruct((nr * nd, 1, dt), jnp.float32),    # per-tile teacher col sums
        ),
        grid=(nr, nd),
        in_specs=[
            pl.BlockSpec(memory_space=pltpu.MemorySpace.SMEM),             # params (scalars)
            pl.BlockSpec((ncrops, tb, dt), lambda i, d: (0, i, d)),        # student
            pl.BlockSpec((2, tb, dt), lambda i, d: (0, i, d)),             # teacher
            pl.BlockSpec((1, dt), lambda i, d: (0, d)),                    # center slice
        ],
        out_specs=(
            pl.BlockSpec((1, 8, 128), lambda i, d: (i, 0, 0)),
            pl.BlockSpec((1, 1, dt), lambda i, d: (i * nd + d, 0, 0)),
        ),
        scratch_shapes=[
            pltpu.VMEM((2, tb, 1), jnp.float32),        # teacher running max
            pltpu.VMEM((2, tb, 1), jnp.float32),        # teacher running sum-exp
            pltpu.VMEM((2, tb, 1), jnp.float32),        # A_sum  = sum_v sum_D E_iq * s_v
            pltpu.VMEM((2, tb, 1), jnp.float32),        # A_diag = sum_D E_iq * s_iq
            pltpu.VMEM((ncrops, tb, 1), jnp.float32),   # student running max (per crop)
            pltpu.VMEM((ncrops, tb, 1), jnp.float32),   # student running sum-exp (per crop)
        ],
        compiler_params=pltpu.CompilerParams(
            # rows axis is fully independent per tile -> megacore-splittable on v7x;
            # the lane axis carries the online-softmax reduction -> sequential.
            dimension_semantics=("parallel", "arbitrary"),
            vmem_limit_bytes=vmem_limit,
        ),
        cost_estimate=cost,
    )(params, student3, teacher3, center_p)

    # tiny epilogue in plain XLA: combine partials + EMA center update
    loss = jnp.sum(loss_parts[:, 0, 0])
    col_sum = csum_parts.reshape(nr, nd, dt).sum(axis=0).reshape(1, nd * dt)[:, :out_dim]
    batch_center = col_sum / n_teacher_rows
    new_center = center_f32 * center_momentum + batch_center * (1.0 - center_momentum)
    return loss, new_center


# ----------------------------------------------------------------------------------
# Pure-JAX reference (mirrors the PyTorch module)
# ----------------------------------------------------------------------------------
def _reference(student_output, teacher_output, center, *,
               ncrops, student_temp, teacher_temp, center_momentum):
    student_out = student_output.astype(jnp.float32) / student_temp
    batch = teacher_output.shape[0] // 2
    student_chunks = [student_out[v * batch:(v + 1) * batch] for v in range(ncrops)]
    teacher_soft = jax.nn.softmax(
        (teacher_output.astype(jnp.float32) - center) / teacher_temp, axis=-1)
    teacher_chunks = [teacher_soft[i * batch:(i + 1) * batch] for i in range(2)]
    total, n = 0.0, 0
    for iq, q in enumerate(teacher_chunks):
        for v in range(ncrops):
            if v == iq:
                continue
            loss = jnp.sum(-q * jax.nn.log_softmax(student_chunks[v], axis=-1), axis=-1)
            total = total + loss.mean()
            n += 1
    total = total / n
    batch_center = (jnp.sum(teacher_output.astype(jnp.float32), axis=0, keepdims=True)
                    / teacher_output.shape[0])
    new_center = center * center_momentum + batch_center * (1 - center_momentum)
    return total, new_center


if __name__ == "__main__":
    # Module hyper-parameters (deterministic, in-script).
    student_temp = 0.1
    center_momentum = 0.9
    warmup_teacher_temp = 0.04
    teacher_temp_final = 0.07
    warmup_teacher_temp_steps = 10
    num_steps = 100
    step = 5
    teacher_temp_schedule = np.concatenate((
        np.linspace(warmup_teacher_temp, teacher_temp_final, warmup_teacher_temp_steps),
        np.ones(num_steps - warmup_teacher_temp_steps) * teacher_temp_final))
    teacher_temp = float(teacher_temp_schedule[step])

    key = jax.random.PRNGKey(0)
    k1, k2, k3, k4 = jax.random.split(key, 4)

    # --- case 1: forced small tiles -> exercises lane tiling (online softmax),
    #             row padding + masking, and the multi-tile partial combine. grid=(2,2).
    out_dim, ncrops, batch = 256, 4, 12
    student_output = jax.random.normal(k1, (ncrops * batch, out_dim), dtype=jnp.float32)
    teacher_output = jax.random.normal(k2, (2 * batch, out_dim), dtype=jnp.float32)
    center = jnp.zeros((1, out_dim), dtype=jnp.float32)

    ref_loss, ref_center = _reference(
        student_output, teacher_output, center,
        ncrops=ncrops, student_temp=student_temp,
        teacher_temp=teacher_temp, center_momentum=center_momentum)
    loss, new_center = dino_loss(
        student_output, teacher_output, center,
        ncrops=ncrops, student_temp=student_temp,
        teacher_temp=teacher_temp, center_momentum=center_momentum,
        row_tile=8, lane_tile=128)
    jax.block_until_ready((loss, new_center, ref_loss, ref_center))
    assert np.allclose(np.asarray(loss), np.asarray(ref_loss), atol=3e-3, rtol=1e-3), \
        (float(loss), float(ref_loss))
    assert np.allclose(np.asarray(new_center), np.asarray(ref_center), atol=1e-5, rtol=1e-5)

    # --- case 2: auto tiling (whole problem resident, grid=(1,1)), non-128-multiple
    #             out_dim -> exercises the lane-padding path, odd crop count.
    out_dim2, ncrops2, batch2 = 320, 5, 16
    student_output2 = jax.random.normal(k3, (ncrops2 * batch2, out_dim2), dtype=jnp.float32)
    teacher_output2 = jax.random.normal(k4, (2 * batch2, out_dim2), dtype=jnp.float32)
    center2 = jnp.zeros((1, out_dim2), dtype=jnp.float32)

    ref_loss2, ref_center2 = _reference(
        student_output2, teacher_output2, center2,
        ncrops=ncrops2, student_temp=student_temp,
        teacher_temp=teacher_temp, center_momentum=center_momentum)
    loss2, new_center2 = dino_loss(
        student_output2, teacher_output2, center2,
        ncrops=ncrops2, student_temp=student_temp,
        teacher_temp=teacher_temp, center_momentum=center_momentum)
    jax.block_until_ready((loss2, new_center2, ref_loss2, ref_center2))
    assert np.allclose(np.asarray(loss2), np.asarray(ref_loss2), atol=3e-3, rtol=1e-3), \
        (float(loss2), float(ref_loss2))
    assert np.allclose(np.asarray(new_center2), np.asarray(ref_center2), atol=1e-5, rtol=1e-5)

    print("KERNEL_OK")
</pallas_src>

<mosaic_0001>
module attributes {stable_mosaic.version = 11 : i64} {
  func.func @_dino_loss_kernel(%arg0: i32, %arg1: i32, %arg2: memref<4xf32, #tpu.memory_space<smem>>, %arg3: memref<4x8x128xf32, #tpu.memory_space<vmem>>, %arg4: memref<2x8x128xf32, #tpu.memory_space<vmem>>, %arg5: memref<1x128xf32, #tpu.memory_space<vmem>>, %arg6: memref<1x8x128xf32, #tpu.memory_space<vmem>>, %arg7: memref<1x1x128xf32, #tpu.memory_space<vmem>>, %arg8: memref<2x8x1xf32, #tpu.memory_space<vmem>>, %arg9: memref<2x8x1xf32, #tpu.memory_space<vmem>>, %arg10: memref<2x8x1xf32, #tpu.memory_space<vmem>>, %arg11: memref<2x8x1xf32, #tpu.memory_space<vmem>>, %arg12: memref<4x8x1xf32, #tpu.memory_space<vmem>>, %arg13: memref<4x8x1xf32, #tpu.memory_space<vmem>>) attributes {dimension_semantics = [#tpu.dimension_semantics<parallel>, #tpu.dimension_semantics<arbitrary>], iteration_bounds = array<i64: 2, 2>, scalar_prefetch = 0 : i64, scratch_operands = 6 : i64, tpu.core_type = #tpu.core_type<tc>, window_params = [{transform_indices = @transform_0, window_bounds = array<i64: 4>}, {transform_indices = @transform_1, window_bounds = array<i64: 4, 8, 128>}, {transform_indices = @transform_2, window_bounds = array<i64: 2, 8, 128>}, {transform_indices = @transform_3, window_bounds = array<i64: 1, 128>}, {transform_indices = @transform_4, window_bounds = array<i64: 1, 8, 128>}, {transform_indices = @transform_5, window_bounds = array<i64: 1, 1, 128>}]} {
    %c0 = arith.constant 0 : index
    %0 = memref.load %arg2[%c0] : memref<4xf32, #tpu.memory_space<smem>>
    %c1 = arith.constant 1 : index
    %1 = memref.load %arg2[%c1] : memref<4xf32, #tpu.memory_space<smem>>
    %c2 = arith.constant 2 : index
    %2 = memref.load %arg2[%c2] : memref<4xf32, #tpu.memory_space<smem>>
    %c3 = arith.constant 3 : index
    %3 = memref.load %arg2[%c3] : memref<4xf32, #tpu.memory_space<smem>>
    %c0_i32 = arith.constant 0 : i32
    %4 = arith.cmpi eq, %arg1, %c0_i32 : i32
    %5 = arith.extui %4 : i1 to i32
    %c0_i32_0 = arith.constant 0 : i32
    %6 = arith.cmpi ne, %5, %c0_i32_0 : i32
    scf.if %6 {
      %cst_114 = arith.constant -1.000000e+30 : f32
      %195 = vector.broadcast %cst_114 : f32 to vector<2x8x1xf32>
      %c0_115 = arith.constant 0 : index
      %c0_116 = arith.constant 0 : index
      %c0_117 = arith.constant 0 : index
      %196 = vector.load %arg8[%c0_115, %c0_116, %c0_117] : memref<2x8x1xf32, #tpu.memory_space<vmem>>, vector<2x8x1xf32>
      tpu.vector_store %arg8[%c0_115, %c0_116, %c0_117], %195 {strides = array<i32>} : memref<2x8x1xf32, #tpu.memory_space<vmem>>, vector<2x8x1xf32>,
      %cst_118 = arith.constant 0.000000e+00 : f32
      %197 = vector.broadcast %cst_118 : f32 to vector<2x8x1xf32>
      %c0_119 = arith.constant 0 : index
      %c0_120 = arith.constant 0 : index
      %c0_121 = arith.constant 0 : index
      %198 = vector.load %arg9[%c0_119, %c0_120, %c0_121] : memref<2x8x1xf32, #tpu.memory_space<vmem>>, vector<2x8x1xf32>
      tpu.vector_store %arg9[%c0_119, %c0_120, %c0_121], %197 {strides = array<i32>} : memref<2x8x1xf32, #tpu.memory_space<vmem>>, vector<2x8x1xf32>,
      %cst_122 = arith.constant 0.000000e+00 : f32
      %199 = vector.broadcast %cst_122 : f32 to vector<2x8x1xf32>
      %c0_123 = arith.constant 0 : index
      %c0_124 = arith.constant 0 : index
      %c0_125 = arith.constant 0 : index
      %200 = vector.load %arg10[%c0_123, %c0_124, %c0_125] : memref<2x8x1xf32, #tpu.memory_space<vmem>>, vector<2x8x1xf32>
      tpu.vector_store %arg10[%c0_123, %c0_124, %c0_125], %199 {strides = array<i32>} : memref<2x8x1xf32, #tpu.memory_space<vmem>>, vector<2x8x1xf32>,
      %cst_126 = arith.constant 0.000000e+00 : f32
      %201 = vector.broadcast %cst_126 : f32 to vector<2x8x1xf32>
      %c0_127 = arith.constant 0 : index
      %c0_128 = arith.constant 0 : index
      %c0_129 = arith.constant 0 : index
      %202 = vector.load %arg11[%c0_127, %c0_128, %c0_129] : memref<2x8x1xf32, #tpu.memory_space<vmem>>, vector<2x8x1xf32>
      tpu.vector_store %arg11[%c0_127, %c0_128, %c0_129], %201 {strides = array<i32>} : memref<2x8x1xf32, #tpu.memory_space<vmem>>, vector<2x8x1xf32>,
      %cst_130 = arith.constant -1.000000e+30 : f32
      %203 = vector.broadcast %cst_130 : f32 to vector<4x8x1xf32>
      %c0_131 = arith.constant 0 : index
      %c0_132 = arith.constant 0 : index
      %c0_133 = arith.constant 0 : index
      %204 = vector.load %arg12[%c0_131, %c0_132, %c0_133] : memref<4x8x1xf32, #tpu.memory_space<vmem>>, vector<4x8x1xf32>
      tpu.vector_store %arg12[%c0_131, %c0_132, %c0_133], %203 {strides = array<i32>} : memref<4x8x1xf32, #tpu.memory_space<vmem>>, vector<4x8x1xf32>,
      %cst_134 = arith.constant 0.000000e+00 : f32
      %205 = vector.broadcast %cst_134 : f32 to vector<4x8x1xf32>
      %c0_135 = arith.constant 0 : index
      %c0_136 = arith.constant 0 : index
      %c0_137 = arith.constant 0 : index
      %206 = vector.load %arg13[%c0_135, %c0_136, %c0_137] : memref<4x8x1xf32, #tpu.memory_space<vmem>>, vector<4x8x1xf32>
      tpu.vector_store %arg13[%c0_135, %c0_136, %c0_137], %205 {strides = array<i32>} : memref<4x8x1xf32, #tpu.memory_space<vmem>>, vector<4x8x1xf32>,
    } else {
    }
    %c0_1 = arith.constant 0 : index
    %c0_2 = arith.constant 0 : index
    %c0_3 = arith.constant 0 : index
    %7 = vector.load %arg4[%c0_1, %c0_2, %c0_3] : memref<2x8x128xf32, #tpu.memory_space<vmem>>, vector<2x8x128xf32>
    %c0_4 = arith.constant 0 : index
    %c0_5 = arith.constant 0 : index
    %8 = vector.load %arg5[%c0_4, %c0_5] : memref<1x128xf32, #tpu.memory_space<vmem>>, vector<1x128xf32>
    %9 = vector.shape_cast %8 : vector<1x128xf32> to vector<1x1x128xf32>
    %10 = vector.broadcast %9 : vector<1x1x128xf32> to vector<2x8x128xf32>
    %11 = arith.subf %7, %10 : vector<2x8x128xf32>
    %12 = vector.broadcast %1 : f32 to vector<2x8x128xf32>
    %13 = arith.mulf %11, %12 : vector<2x8x128xf32>
    %c0_6 = arith.constant 0 : index
    %c0_7 = arith.constant 0 : index
    %c0_8 = arith.constant 0 : index
    %14 = vector.load %arg8[%c0_6, %c0_7, %c0_8] : memref<2x8x1xf32, #tpu.memory_space<vmem>>, vector<2x8x1xf32>
    %cst = arith.constant dense<0xFF800000> : vector<2x8xf32>
    %15 = vector.multi_reduction <maximumf>, %13, %cst [2] : vector<2x8x128xf32> to vector<2x8xf32>
    %16 = vector.shape_cast %15 : vector<2x8xf32> to vector<2x8x1xf32>
    %17 = arith.maximumf %14, %16 : vector<2x8x1xf32>
    %18 = arith.subf %14, %17 : vector<2x8x1xf32>
    %19 = math.exp %18 : vector<2x8x1xf32>
    %20 = vector.broadcast %17 : vector<2x8x1xf32> to vector<2x8x128xf32>
    %21 = arith.subf %13, %20 : vector<2x8x128xf32>
    %22 = math.exp %21 : vector<2x8x128xf32>
    %c0_9 = arith.constant 0 : index
    %c0_10 = arith.constant 0 : index
    %c0_11 = arith.constant 0 : index
    %23 = vector.load %arg8[%c0_9, %c0_10, %c0_11] : memref<2x8x1xf32, #tpu.memory_space<vmem>>, vector<2x8x1xf32>
    tpu.vector_store %arg8[%c0_9, %c0_10, %c0_11], %17 {strides = array<i32>} : memref<2x8x1xf32, #tpu.memory_space<vmem>>, vector<2x8x1xf32>,
    %c0_12 = arith.constant 0 : index
    %c0_13 = arith.constant 0 : index
    %c0_14 = arith.constant 0 : index
    %24 = vector.load %arg9[%c0_12, %c0_13, %c0_14] : memref<2x8x1xf32, #tpu.memory_space<vmem>>, vector<2x8x1xf32>
    %25 = arith.mulf %19, %24 : vector<2x8x1xf32>
    %cst_15 = arith.constant dense<0.000000e+00> : vector<2x8xf32>
    %26 = vector.multi_reduction <add>, %22, %cst_15 [2] : vector<2x8x128xf32> to vector<2x8xf32>
    %27 = vector.shape_cast %26 : vector<2x8xf32> to vector<2x8x1xf32>
    %28 = arith.addf %25, %27 : vector<2x8x1xf32>
    %c0_16 = arith.constant 0 : index
    %c0_17 = arith.constant 0 : index
    %c0_18 = arith.constant 0 : index
    %29 = vector.load %arg9[%c0_16, %c0_17, %c0_18] : memref<2x8x1xf32, #tpu.memory_space<vmem>>, vector<2x8x1xf32>
    tpu.vector_store %arg9[%c0_16, %c0_17, %c0_18], %28 {strides = array<i32>} : memref<2x8x1xf32, #tpu.memory_space<vmem>>, vector<2x8x1xf32>,
    %30 = tpu.iota {dimensions = array<i32: 0>} : vector<2x1x1xi32>
    %cst_19 = arith.constant 0.000000e+00 : f32
    %31 = vector.broadcast %cst_19 : f32 to vector<2x8x1xf32>
    %cst_20 = arith.constant 0.000000e+00 : f32
    %32 = vector.broadcast %cst_20 : f32 to vector<2x8x1xf32>
    %c0_21 = arith.constant 0 : index
    %c0_22 = arith.constant 0 : index
    %c0_23 = arith.constant 0 : index
    %33 = vector.load %arg3[%c0_21, %c0_22, %c0_23] : memref<4x8x128xf32, #tpu.memory_space<vmem>>, vector<1x8x128xf32>
    %34 = vector.shape_cast %33 : vector<1x8x128xf32> to vector<8x128xf32>
    %35 = vector.broadcast %0 : f32 to vector<8x128xf32>
    %36 = arith.mulf %34, %35 : vector<8x128xf32>
    %c0_24 = arith.constant 0 : index
    %c0_25 = arith.constant 0 : index
    %c0_26 = arith.constant 0 : index
    %37 = vector.load %arg12[%c0_24, %c0_25, %c0_26] : memref<4x8x1xf32, #tpu.memory_space<vmem>>, vector<1x8x1xf32>
    %38 = vector.shape_cast %37 : vector<1x8x1xf32> to vector<8x1xf32>
    %cst_27 = arith.constant dense<0xFF800000> : vector<8xf32>
    %39 = vector.multi_reduction <maximumf>, %36, %cst_27 [1] : vector<8x128xf32> to vector<8xf32>
    %40 = vector.shape_cast %39 : vector<8xf32> to vector<8x1xf32>
    %41 = arith.maximumf %38, %40 : vector<8x1xf32>
    %42 = arith.subf %38, %41 : vector<8x1xf32>
    %43 = math.exp %42 : vector<8x1xf32>
    %c0_28 = arith.constant 0 : index
    %c0_29 = arith.constant 0 : index
    %c0_30 = arith.constant 0 : index
    %44 = vector.load %arg13[%c0_28, %c0_29, %c0_30] : memref<4x8x1xf32, #tpu.memory_space<vmem>>, vector<1x8x1xf32>
    %45 = vector.shape_cast %44 : vector<1x8x1xf32> to vector<8x1xf32>
    %46 = arith.mulf %43, %45 : vector<8x1xf32>
    %47 = vector.broadcast %41 : vector<8x1xf32> to vector<8x128xf32>
    %48 = arith.subf %36, %47 : vector<8x128xf32>
    %49 = math.exp %48 : vector<8x128xf32>
    %cst_31 = arith.constant dense<0.000000e+00> : vector<8xf32>
    %50 = vector.multi_reduction <add>, %49, %cst_31 [1] : vector<8x128xf32> to vector<8xf32>
    %51 = vector.shape_cast %50 : vector<8xf32> to vector<8x1xf32>
    %52 = arith.addf %46, %51 : vector<8x1xf32>
    %c0_32 = arith.constant 0 : index
    %c0_33 = arith.constant 0 : index
    %c0_34 = arith.constant 0 : index
    %53 = vector.load %arg13[%c0_32, %c0_33, %c0_34] : memref<4x8x1xf32, #tpu.memory_space<vmem>>, vector<1x8x1xf32>
    %54 = vector.shape_cast %53 : vector<1x8x1xf32> to vector<8x1xf32>
    %55 = vector.shape_cast %52 : vector<8x1xf32> to vector<1x8x1xf32>
    tpu.vector_store %arg13[%c0_32, %c0_33, %c0_34], %55 {strides = array<i32>} : memref<4x8x1xf32, #tpu.memory_space<vmem>>, vector<1x8x1xf32>,
    %c0_35 = arith.constant 0 : index
    %c0_36 = arith.constant 0 : index
    %c0_37 = arith.constant 0 : index
    %56 = vector.load %arg12[%c0_35, %c0_36, %c0_37] : memref<4x8x1xf32, #tpu.memory_space<vmem>>, vector<1x8x1xf32>
    %57 = vector.shape_cast %56 : vector<1x8x1xf32> to vector<8x1xf32>
    %58 = vector.shape_cast %41 : vector<8x1xf32> to vector<1x8x1xf32>
    tpu.vector_store %arg12[%c0_35, %c0_36, %c0_37], %58 {strides = array<i32>} : memref<4x8x1xf32, #tpu.memory_space<vmem>>, vector<1x8x1xf32>,
    %59 = vector.shape_cast %36 : vector<8x128xf32> to vector<1x8x128xf32>
    %60 = vector.broadcast %59 : vector<1x8x128xf32> to vector<2x8x128xf32>
    %61 = arith.mulf %22, %60 : vector<2x8x128xf32>
    %cst_38 = arith.constant dense<0.000000e+00> : vector<2x8xf32>
    %62 = vector.multi_reduction <add>, %61, %cst_38 [2] : vector<2x8x128xf32> to vector<2x8xf32>
    %63 = vector.shape_cast %62 : vector<2x8xf32> to vector<2x8x1xf32>
    %64 = arith.addf %31, %63 : vector<2x8x1xf32>
    %c0_i32_39 = arith.constant 0 : i32
    %65 = vector.broadcast %c0_i32_39 : i32 to vector<2x1x1xi32>
    %66 = arith.cmpi eq, %30, %65 : vector<2x1x1xi32>
    %cst_40 = arith.constant 0.000000e+00 : f32
    %67 = vector.shape_cast %66 : vector<2x1x1xi1> to vector<2x1x1xi1>
    %68 = vector.broadcast %67 : vector<2x1x1xi1> to vector<2x8x1xi1>
    %69 = vector.broadcast %cst_40 : f32 to vector<2x8x1xf32>
    %70 = arith.select %68, %63, %69 : vector<2x8x1xi1>, vector<2x8x1xf32>
    %71 = arith.addf %32, %70 : vector<2x8x1xf32>
    %c1_41 = arith.constant 1 : index
    %c0_42 = arith.constant 0 : index
    %c0_43 = arith.constant 0 : index
    %72 = vector.load %arg3[%c1_41, %c0_42, %c0_43] : memref<4x8x128xf32, #tpu.memory_space<vmem>>, vector<1x8x128xf32>
    %73 = vector.shape_cast %72 : vector<1x8x128xf32> to vector<8x128xf32>
    %74 = vector.broadcast %0 : f32 to vector<8x128xf32>
    %75 = arith.mulf %73, %74 : vector<8x128xf32>
    %c1_44 = arith.constant 1 : index
    %c0_45 = arith.constant 0 : index
    %c0_46 = arith.constant 0 : index
    %76 = vector.load %arg12[%c1_44, %c0_45, %c0_46] : memref<4x8x1xf32, #tpu.memory_space<vmem>>, vector<1x8x1xf32>
    %77 = vector.shape_cast %76 : vector<1x8x1xf32> to vector<8x1xf32>
    %cst_47 = arith.constant dense<0xFF800000> : vector<8xf32>
    %78 = vector.multi_reduction <maximumf>, %75, %cst_47 [1] : vector<8x128xf32> to vector<8xf32>
    %79 = vector.shape_cast %78 : vector<8xf32> to vector<8x1xf32>
    %80 = arith.maximumf %77, %79 : vector<8x1xf32>
    %81 = arith.subf %77, %80 : vector<8x1xf32>
    %82 = math.exp %81 : vector<8x1xf32>
    %c1_48 = arith.constant 1 : index
    %c0_49 = arith.constant 0 : index
    %c0_50 = arith.constant 0 : index
    %83 = vector.load %arg13[%c1_48, %c0_49, %c0_50] : memref<4x8x1xf32, #tpu.memory_space<vmem>>, vector<1x8x1xf32>
    %84 = vector.shape_cast %83 : vector<1x8x1xf32> to vector<8x1xf32>
    %85 = arith.mulf %82, %84 : vector<8x1xf32>
    %86 = vector.broadcast %80 : vector<8x1xf32> to vector<8x128xf32>
    %87 = arith.subf %75, %86 : vector<8x128xf32>
    %88 = math.exp %87 : vector<8x128xf32>
    %cst_51 = arith.constant dense<0.000000e+00> : vector<8xf32>
    %89 = vector.multi_reduction <add>, %88, %cst_51 [1] : vector<8x128xf32> to vector<8xf32>
    %90 = vector.shape_cast %89 : vector<8xf32> to vector<8x1xf32>
    %91 = arith.addf %85, %90 : vector<8x1xf32>
    %c1_52 = arith.constant 1 : index
    %c0_53 = arith.constant 0 : index
    %c0_54 = arith.constant 0 : index
    %92 = vector.load %arg13[%c1_52, %c0_53, %c0_54] : memref<4x8x1xf32, #tpu.memory_space<vmem>>, vector<1x8x1xf32>
    %93 = vector.shape_cast %92 : vector<1x8x1xf32> to vector<8x1xf32>
    %94 = vector.shape_cast %91 : vector<8x1xf32> to vector<1x8x1xf32>
    tpu.vector_store %arg13[%c1_52, %c0_53, %c0_54], %94 {strides = array<i32>} : memref<4x8x1xf32, #tpu.memory_space<vmem>>, vector<1x8x1xf32>,
    %c1_55 = arith.constant 1 : index
    %c0_56 = arith.constant 0 : index
    %c0_57 = arith.constant 0 : index
    %95 = vector.load %arg12[%c1_55, %c0_56, %c0_57] : memref<4x8x1xf32, #tpu.memory_space<vmem>>, vector<1x8x1xf32>
    %96 = vector.shape_cast %95 : vector<1x8x1xf32> to vector<8x1xf32>
    %97 = vector.shape_cast %80 : vector<8x1xf32> to vector<1x8x1xf32>
    tpu.vector_store %arg12[%c1_55, %c0_56, %c0_57], %97 {strides = array<i32>} : memref<4x8x1xf32, #tpu.memory_space<vmem>>, vector<1x8x1xf32>,
    %98 = vector.shape_cast %75 : vector<8x128xf32> to vector<1x8x128xf32>
    %99 = vector.broadcast %98 : vector<1x8x128xf32> to vector<2x8x128xf32>
    %100 = arith.mulf %22, %99 : vector<2x8x128xf32>
    %cst_58 = arith.constant dense<0.000000e+00> : vector<2x8xf32>
    %101 = vector.multi_reduction <add>, %100, %cst_58 [2] : vector<2x8x128xf32> to vector<2x8xf32>
    %102 = vector.shape_cast %101 : vector<2x8xf32> to vector<2x8x1xf32>
    %103 = arith.addf %64, %102 : vector<2x8x1xf32>
    %c1_i32 = arith.constant 1 : i32
    %104 = vector.broadcast %c1_i32 : i32 to vector<2x1x1xi32>
    %105 = arith.cmpi eq, %30, %104 : vector<2x1x1xi32>
    %cst_59 = arith.constant 0.000000e+00 : f32
    %106 = vector.shape_cast %105 : vector<2x1x1xi1> to vector<2x1x1xi1>
    %107 = vector.broadcast %106 : vector<2x1x1xi1> to vector<2x8x1xi1>
    %108 = vector.broadcast %cst_59 : f32 to vector<2x8x1xf32>
    %109 = arith.select %107, %102, %108 : vector<2x8x1xi1>, vector<2x8x1xf32>
    %110 = arith.addf %71, %109 : vector<2x8x1xf32>
    %c2_60 = arith.constant 2 : index
    %c0_61 = arith.constant 0 : index
    %c0_62 = arith.constant 0 : index
    %111 = vector.load %arg3[%c2_60, %c0_61, %c0_62] : memref<4x8x128xf32, #tpu.memory_space<vmem>>, vector<1x8x128xf32>
    %112 = vector.shape_cast %111 : vector<1x8x128xf32> to vector<8x128xf32>
    %113 = vector.broadcast %0 : f32 to vector<8x128xf32>
    %114 = arith.mulf %112, %113 : vector<8x128xf32>
    %c2_63 = arith.constant 2 : index
    %c0_64 = arith.constant 0 : index
    %c0_65 = arith.constant 0 : index
    %115 = vector.load %arg12[%c2_63, %c0_64, %c0_65] : memref<4x8x1xf32, #tpu.memory_space<vmem>>, vector<1x8x1xf32>
    %116 = vector.shape_cast %115 : vector<1x8x1xf32> to vector<8x1xf32>
    %cst_66 = arith.constant dense<0xFF800000> : vector<8xf32>
    %117 = vector.multi_reduction <maximumf>, %114, %cst_66 [1] : vector<8x128xf32> to vector<8xf32>
    %118 = vector.shape_cast %117 : vector<8xf32> to vector<8x1xf32>
    %119 = arith.maximumf %116, %118 : vector<8x1xf32>
    %120 = arith.subf %116, %119 : vector<8x1xf32>
    %121 = math.exp %120 : vector<8x1xf32>
    %c2_67 = arith.constant 2 : index
    %c0_68 = arith.constant 0 : index
    %c0_69 = arith.constant 0 : index
    %122 = vector.load %arg13[%c2_67, %c0_68, %c0_69] : memref<4x8x1xf32, #tpu.memory_space<vmem>>, vector<1x8x1xf32>
    %123 = vector.shape_cast %122 : vector<1x8x1xf32> to vector<8x1xf32>
    %124 = arith.mulf %121, %123 : vector<8x1xf32>
    %125 = vector.broadcast %119 : vector<8x1xf32> to vector<8x128xf32>
    %126 = arith.subf %114, %125 : vector<8x128xf32>
    %127 = math.exp %126 : vector<8x128xf32>
    %cst_70 = arith.constant dense<0.000000e+00> : vector<8xf32>
    %128 = vector.multi_reduction <add>, %127, %cst_70 [1] : vector<8x128xf32> to vector<8xf32>
    %129 = vector.shape_cast %128 : vector<8xf32> to vector<8x1xf32>
    %130 = arith.addf %124, %129 : vector<8x1xf32>
    %c2_71 = arith.constant 2 : index
    %c0_72 = arith.constant 0 : index
    %c0_73 = arith.constant 0 : index
    %131 = vector.load %arg13[%c2_71, %c0_72, %c0_73] : memref<4x8x1xf32, #tpu.memory_space<vmem>>, vector<1x8x1xf32>
    %132 = vector.shape_cast %131 : vector<1x8x1xf32> to vector<8x1xf32>
    %133 = vector.shape_cast %130 : vector<8x1xf32> to vector<1x8x1xf32>
    tpu.vector_store %arg13[%c2_71, %c0_72, %c0_73], %133 {strides = array<i32>} : memref<4x8x1xf32, #tpu.memory_space<vmem>>, vector<1x8x1xf32>,
    %c2_74 = arith.constant 2 : index
    %c0_75 = arith.constant 0 : index
    %c0_76 = arith.constant 0 : index
    %134 = vector.load %arg12[%c2_74, %c0_75, %c0_76] : memref<4x8x1xf32, #tpu.memory_space<vmem>>, vector<1x8x1xf32>
    %135 = vector.shape_cast %134 : vector<1x8x1xf32> to vector<8x1xf32>
    %136 = vector.shape_cast %119 : vector<8x1xf32> to vector<1x8x1xf32>
    tpu.vector_store %arg12[%c2_74, %c0_75, %c0_76], %136 {strides = array<i32>} : memref<4x8x1xf32, #tpu.memory_space<vmem>>, vector<1x8x1xf32>,
    %137 = vector.shape_cast %114 : vector<8x128xf32> to vector<1x8x128xf32>
    %138 = vector.broadcast %137 : vector<1x8x128xf32> to vector<2x8x128xf32>
    %139 = arith.mulf %22, %138 : vector<2x8x128xf32>
    %cst_77 = arith.constant dense<0.000000e+00> : vector<2x8xf32>
    %140 = vector.multi_reduction <add>, %139, %cst_77 [2] : vector<2x8x128xf32> to vector<2x8xf32>
    %141 = vector.shape_cast %140 : vector<2x8xf32> to vector<2x8x1xf32>
    %142 = arith.addf %103, %141 : vector<2x8x1xf32>
    %c3_78 = arith.constant 3 : index
    %c0_79 = arith.constant 0 : index
    %c0_80 = arith.constant 0 : index
    %143 = vector.load %arg3[%c3_78, %c0_79, %c0_80] : memref<4x8x128xf32, #tpu.memory_space<vmem>>, vector<1x8x128xf32>
    %144 = vector.shape_cast %143 : vector<1x8x128xf32> to vector<8x128xf32>
    %145 = vector.broadcast %0 : f32 to vector<8x128xf32>
    %146 = arith.mulf %144, %145 : vector<8x128xf32>
    %c3_81 = arith.constant 3 : index
    %c0_82 = arith.constant 0 : index
    %c0_83 = arith.constant 0 : index
    %147 = vector.load %arg12[%c3_81, %c0_82, %c0_83] : memref<4x8x1xf32, #tpu.memory_space<vmem>>, vector<1x8x1xf32>
    %148 = vector.shape_cast %147 : vector<1x8x1xf32> to vector<8x1xf32>
    %cst_84 = arith.constant dense<0xFF800000> : vector<8xf32>
    %149 = vector.multi_reduction <maximumf>, %146, %cst_84 [1] : vector<8x128xf32> to vector<8xf32>
    %150 = vector.shape_cast %149 : vector<8xf32> to vector<8x1xf32>
    %151 = arith.maximumf %148, %150 : vector<8x1xf32>
    %152 = arith.subf %148, %151 : vector<8x1xf32>
    %153 = math.exp %152 : vector<8x1xf32>
    %c3_85 = arith.constant 3 : index
    %c0_86 = arith.constant 0 : index
    %c0_87 = arith.constant 0 : index
    %154 = vector.load %arg13[%c3_85, %c0_86, %c0_87] : memref<4x8x1xf32, #tpu.memory_space<vmem>>, vector<1x8x1xf32>
    %155 = vector.shape_cast %154 : vector<1x8x1xf32> to vector<8x1xf32>
    %156 = arith.mulf %153, %155 : vector<8x1xf32>
    %157 = vector.broadcast %151 : vector<8x1xf32> to vector<8x128xf32>
    %158 = arith.subf %146, %157 : vector<8x128xf32>
    %159 = math.exp %158 : vector<8x128xf32>
    %cst_88 = arith.constant dense<0.000000e+00> : vector<8xf32>
    %160 = vector.multi_reduction <add>, %159, %cst_88 [1] : vector<8x128xf32> to vector<8xf32>
    %161 = vector.shape_cast %160 : vector<8xf32> to vector<8x1xf32>
    %162 = arith.addf %156, %161 : vector<8x1xf32>
    %c3_89 = arith.constant 3 : index
    %c0_90 = arith.constant 0 : index
    %c0_91 = arith.constant 0 : index
    %163 = vector.load %arg13[%c3_89, %c0_90, %c0_91] : memref<4x8x1xf32, #tpu.memory_space<vmem>>, vector<1x8x1xf32>
    %164 = vector.shape_cast %163 : vector<1x8x1xf32> to vector<8x1xf32>
    %165 = vector.shape_cast %162 : vector<8x1xf32> to vector<1x8x1xf32>
    tpu.vector_store %arg13[%c3_89, %c0_90, %c0_91], %165 {strides = array<i32>} : memref<4x8x1xf32, #tpu.memory_space<vmem>>, vector<1x8x1xf32>,
    %c3_92 = arith.constant 3 : index
    %c0_93 = arith.constant 0 : index
    %c0_94 = arith.constant 0 : index
    %166 = vector.load %arg12[%c3_92, %c0_93, %c0_94] : memref<4x8x1xf32, #tpu.memory_space<vmem>>, vector<1x8x1xf32>
    %167 = vector.shape_cast %166 : vector<1x8x1xf32> to vector<8x1xf32>
    %168 = vector.shape_cast %151 : vector<8x1xf32> to vector<1x8x1xf32>
    tpu.vector_store %arg12[%c3_92, %c0_93, %c0_94], %168 {strides = array<i32>} : memref<4x8x1xf32, #tpu.memory_space<vmem>>, vector<1x8x1xf32>,
    %169 = vector.shape_cast %146 : vector<8x128xf32> to vector<1x8x128xf32>
    %170 = vector.broadcast %169 : vector<1x8x128xf32> to vector<2x8x128xf32>
    %171 = arith.mulf %22, %170 : vector<2x8x128xf32>
    %cst_95 = arith.constant dense<0.000000e+00> : vector<2x8xf32>
    %172 = vector.multi_reduction <add>, %171, %cst_95 [2] : vector<2x8x128xf32> to vector<2x8xf32>
    %173 = vector.shape_cast %172 : vector<2x8xf32> to vector<2x8x1xf32>
    %174 = arith.addf %142, %173 : vector<2x8x1xf32>
    %c0_96 = arith.constant 0 : index
    %c0_97 = arith.constant 0 : index
    %c0_98 = arith.constant 0 : index
    %175 = vector.load %arg10[%c0_96, %c0_97, %c0_98] : memref<2x8x1xf32, #tpu.memory_space<vmem>>, vector<2x8x1xf32>
    %176 = arith.mulf %19, %175 : vector<2x8x1xf32>
    %177 = arith.addf %176, %174 : vector<2x8x1xf32>
    %c0_99 = arith.constant 0 : index
    %c0_100 = arith.constant 0 : index
    %c0_101 = arith.constant 0 : index
    %178 = vector.load %arg10[%c0_99, %c0_100, %c0_101] : memref<2x8x1xf32, #tpu.memory_space<vmem>>, vector<2x8x1xf32>
    tpu.vector_store %arg10[%c0_99, %c0_100, %c0_101], %177 {strides = array<i32>} : memref<2x8x1xf32, #tpu.memory_space<vmem>>, vector<2x8x1xf32>,
    %c0_102 = arith.constant 0 : index
    %c0_103 = arith.constant 0 : index
    %c0_104 = arith.constant 0 : index
    %179 = vector.load %arg11[%c0_102, %c0_103, %c0_104] : memref<2x8x1xf32, #tpu.memory_space<vmem>>, vector<2x8x1xf32>
    %180 = arith.mulf %19, %179 : vector<2x8x1xf32>
    %181 = arith.addf %180, %110 : vector<2x8x1xf32>
    %c0_105 = arith.constant 0 : index
    %c0_106 = arith.constant 0 : index
    %c0_107 = arith.constant 0 : index
    %182 = vector.load %arg11[%c0_105, %c0_106, %c0_107] : memref<2x8x1xf32, #tpu.memory_space<vmem>>, vector<2x8x1xf32>
    tpu.vector_store %arg11[%c0_105, %c0_106, %c0_107], %181 {strides = array<i32>} : memref<2x8x1xf32, #tpu.memory_space<vmem>>, vector<2x8x1xf32>,
    %183 = vector.extract_strided_slice %7 {offsets = [0, 0, 0], sizes = [1, 8, 128], strides = [1, 1, 1]} : vector<2x8x128xf32> to vector<1x8x128xf32>
    %184 = vector.shape_cast %183 : vector<1x8x128xf32> to vector<8x128xf32>
    %185 = vector.extract_strided_slice %7 {offsets = [1, 0, 0], sizes = [1, 8, 128], strides = [1, 1, 1]} : vector<2x8x128xf32> to vector<1x8x128xf32>
    %186 = vector.shape_cast %185 : vector<1x8x128xf32> to vector<8x128xf32>
    %187 = arith.addf %184, %186 : vector<8x128xf32>
    %cst_108 = arith.constant dense<0.000000e+00> : vector<128xf32>
    %188 = vector.multi_reduction <add>, %187, %cst_108 [0] : vector<8x128xf32> to vector<128xf32>
    %189 = vector.shape_cast %188 : vector<128xf32> to vector<1x128xf32>
    %190 = vector.shape_cast %189 : vector<1x128xf32> to vector<1x1x128xf32>
    %c0_109 = arith.constant 0 : index
    %c0_110 = arith.constant 0 : index
    %c0_111 = arith.constant 0 : index
    %191 = vector.load %arg7[%c0_109, %c0_110, %c0_111] : memref<1x1x128xf32, #tpu.memory_space<vmem>>, vector<1x1x128xf32>
    tpu.vector_store %arg7[%c0_109, %c0_110, %c0_111], %190 {strides = array<i32>} : memref<1x1x128xf32, #tpu.memory_space<vmem>>, vector<1x1x128xf32>,
    %c1_i32_112 = arith.constant 1 : i32
    %192 = arith.cmpi eq, %arg1, %c1_i32_112 : i32
    %193 = arith.extui %192 : i1 to i32
    %c0_i32_113 = arith.constant 0 : i32
    %194 = arith.cmpi ne, %193, %c0_i32_113 : i32
    scf.if %194 {
      %c0_114 = arith.constant 0 : index
      %c0_115 = arith.constant 0 : index
      %c0_116 = arith.constant 0 : index
      %195 = vector.load %arg12[%c0_114, %c0_115, %c0_116] : memref<4x8x1xf32, #tpu.memory_space<vmem>>, vector<4x8x1xf32>
      %c0_117 = arith.constant 0 : index
      %c0_118 = arith.constant 0 : index
      %c0_119 = arith.constant 0 : index
      %196 = vector.load %arg13[%c0_117, %c0_118, %c0_119] : memref<4x8x1xf32, #tpu.memory_space<vmem>>, vector<4x8x1xf32>
      %197 = math.log %196 : vector<4x8x1xf32>
      %198 = arith.addf %195, %197 : vector<4x8x1xf32>
      %cst_120 = arith.constant dense<0.000000e+00> : vector<8x1xf32>
      %199 = vector.multi_reduction <add>, %198, %cst_120 [0] : vector<4x8x1xf32> to vector<8x1xf32>
      %c0_121 = arith.constant 0 : index
      %c0_122 = arith.constant 0 : index
      %c0_123 = arith.constant 0 : index
      %200 = vector.load %arg10[%c0_121, %c0_122, %c0_123] : memref<2x8x1xf32, #tpu.memory_space<vmem>>, vector<2x8x1xf32>
      %c0_124 = arith.constant 0 : index
      %c0_125 = arith.constant 0 : index
      %c0_126 = arith.constant 0 : index
      %201 = vector.load %arg11[%c0_124, %c0_125, %c0_126] : memref<2x8x1xf32, #tpu.memory_space<vmem>>, vector<2x8x1xf32>
      %202 = arith.subf %200, %201 : vector<2x8x1xf32>
      %c0_127 = arith.constant 0 : index
      %c0_128 = arith.constant 0 : index
      %c0_129 = arith.constant 0 : index
      %203 = vector.load %arg9[%c0_127, %c0_128, %c0_129] : memref<2x8x1xf32, #tpu.memory_space<vmem>>, vector<2x8x1xf32>
      %204 = arith.divf %202, %203 : vector<2x8x1xf32>
      %cst_130 = arith.constant 2.000000e+00 : f32
      %205 = vector.broadcast %cst_130 : f32 to vector<8x1xf32>
      %206 = arith.mulf %205, %199 : vector<8x1xf32>
      %207 = vector.extract_strided_slice %198 {offsets = [0, 0, 0], sizes = [1, 8, 1], strides = [1, 1, 1]} : vector<4x8x1xf32> to vector<1x8x1xf32>
      %208 = vector.shape_cast %207 : vector<1x8x1xf32> to vector<8x1xf32>
      %209 = arith.subf %206, %208 : vector<8x1xf32>
      %210 = vector.extract_strided_slice %198 {offsets = [1, 0, 0], sizes = [1, 8, 1], strides = [1, 1, 1]} : vector<4x8x1xf32> to vector<1x8x1xf32>
      %211 = vector.shape_cast %210 : vector<1x8x1xf32> to vector<8x1xf32>
      %212 = arith.subf %209, %211 : vector<8x1xf32>
      %213 = vector.extract_strided_slice %204 {offsets = [0, 0, 0], sizes = [1, 8, 1], strides = [1, 1, 1]} : vector<2x8x1xf32> to vector<1x8x1xf32>
      %214 = vector.shape_cast %213 : vector<1x8x1xf32> to vector<8x1xf32>
      %215 = arith.subf %212, %214 : vector<8x1xf32>
      %216 = vector.extract_strided_slice %204 {offsets = [1, 0, 0], sizes = [1, 8, 1], strides = [1, 1, 1]} : vector<2x8x1xf32> to vector<1x8x1xf32>
      %217 = vector.shape_cast %216 : vector<1x8x1xf32> to vector<8x1xf32>
      %218 = arith.subf %215, %217 : vector<8x1xf32>
      %c8_i32 = arith.constant 8 : i32
      %219 = arith.muli %arg0, %c8_i32 : i32
      %220 = tpu.iota {dimensions = array<i32: 0>} : vector<8x1xi32>
      %221 = vector.broadcast %219 : i32 to vector<8x1xi32>
      %222 = arith.addi %221, %220 : vector<8x1xi32>
      %c12_i32 = arith.constant 12 : i32
      %223 = vector.broadcast %c12_i32 : i32 to vector<8x1xi32>
      %224 = arith.cmpi slt, %222, %223 : vector<8x1xi32>
      %cst_131 = arith.constant 0.000000e+00 : f32
      %225 = vector.broadcast %cst_131 : f32 to vector<8x1xf32>
      %226 = arith.select %224, %218, %225 : vector<8x1xi1>, vector<8x1xf32>
      %227 = vector.shape_cast %226 : vector<8x1xf32> to vector<1x8x1xf32>
      %cst_132 = arith.constant dense<0.000000e+00> : vector<1xf32>
      %228 = vector.multi_reduction <add>, %227, %cst_132 [1, 2] : vector<1x8x1xf32> to vector<1xf32>
      %229 = vector.shape_cast %228 : vector<1xf32> to vector<1x1x1xf32>
      %230 = vector.extract %229[0, 0, 0] : f32 from vector<1x1x1xf32>
      %231 = arith.mulf %230, %2 : f32
      %232 = arith.mulf %231, %3 : f32
      %233 = vector.broadcast %232 : f32 to vector<1x8x128xf32>
      %c0_133 = arith.constant 0 : index
      %c0_134 = arith.constant 0 : index
      %c0_135 = arith.constant 0 : index
      %234 = vector.load %arg6[%c0_133, %c0_134, %c0_135] : memref<1x8x128xf32, #tpu.memory_space<vmem>>, vector<1x8x128xf32>
      tpu.vector_store %arg6[%c0_133, %c0_134, %c0_135], %233 {strides = array<i32>} : memref<1x8x128xf32, #tpu.memory_space<vmem>>, vector<1x8x128xf32>,
    } else {
    }
    return
  }
  func.func @transform_0(%arg0: i32, %arg1: i32) -> i32 {
    %c0_i32 = arith.constant 0 : i32
    %c0_i32_0 = arith.constant 0 : i32
    return %c0_i32 : i32
  }
  func.func @transform_1(%arg0: i32, %arg1: i32) -> (i32, i32, i32) {
    %c0_i32 = arith.constant 0 : i32
    %c0_i32_0 = arith.constant 0 : i32
    return %c0_i32, %arg0, %arg1 : i32, i32, i32
  }
  func.func @transform_2(%arg0: i32, %arg1: i32) -> (i32, i32, i32) {
    %c0_i32 = arith.constant 0 : i32
    %c0_i32_0 = arith.constant 0 : i32
    return %c0_i32, %arg0, %arg1 : i32, i32, i32
  }
  func.func @transform_3(%arg0: i32, %arg1: i32) -> (i32, i32) {
    %c0_i32 = arith.constant 0 : i32
    %c0_i32_0 = arith.constant 0 : i32
    return %c0_i32, %arg1 : i32, i32
  }
  func.func @transform_4(%arg0: i32, %arg1: i32) -> (i32, i32, i32) {
    %c0_i32 = arith.constant 0 : i32
    %c0_i32_0 = arith.constant 0 : i32
    %c0_i32_1 = arith.constant 0 : i32
    return %arg0, %c0_i32, %c0_i32_0 : i32, i32, i32
  }
  func.func @transform_5(%arg0: i32, %arg1: i32) -> (i32, i32, i32) {
    %c2_i32 = arith.constant 2 : i32
    %0 = arith.muli %arg0, %c2_i32 : i32
    %1 = arith.addi %0, %arg1 : i32
    %c0_i32 = arith.constant 0 : i32
    %c0_i32_0 = arith.constant 0 : i32
    %c0_i32_1 = arith.constant 0 : i32
    return %1, %c0_i32, %c0_i32_0 : i32, i32, i32
  }
}

</mosaic_0001>

<llo_original>
// kernel: tpu_custom_call.1
$region0: #{tpu_custom_call.1}
  #allocation0 [shape = 'u32[]', space=smem, size = 0x4, offset = 0x4, fixed_abs, tag = 'smem constant byte address 0x4 - core index']
  #allocation1 [shape = 'u32[144,128]{1,0:T(1,128)}', space=vmem, size = 0x12000, scoped, tag = 'internal scratch']
  #allocation2 [shape = 'f32[2,8,1]{2,1,0:T(8,128)}', space=vmem, size = 0x2000, scoped, tag = 'scratch operand']
  #allocation3 [shape = 'f32[2,8,1]{2,1,0:T(8,128)}', space=vmem, size = 0x2000, scoped, tag = 'scratch operand']
  #allocation4 [shape = 'f32[2,8,1]{2,1,0:T(8,128)}', space=vmem, size = 0x2000, scoped, tag = 'scratch operand']
  #allocation5 [shape = 'f32[2,8,1]{2,1,0:T(8,128)}', space=vmem, size = 0x2000, scoped, tag = 'scratch operand']
  #allocation6 [shape = 'f32[4,8,1]{2,1,0:T(8,128)}', space=vmem, size = 0x4000, scoped, tag = 'scratch operand']
  #allocation7 [shape = 'f32[4,8,1]{2,1,0:T(8,128)}', space=vmem, size = 0x4000, scoped, tag = 'scratch operand']
  %s0 = inlined_call_operand.hbm [shape: f32[4], index: 0, kind: input, shape index: {}]
  %s1 = inlined_call_operand.hbm [shape: f32[4,16,256], index: 1, kind: input, shape index: {}]
  %s2 = inlined_call_operand.hbm [shape: f32[2,16,256], index: 2, kind: input, shape index: {}]
  %s3 = inlined_call_operand.vmem [shape: f32[1,256], index: 3, kind: input, shape index: {}]
  %s4 = inlined_call_operand.hbm [shape: f32[2,8,128], index: 4, kind: output, shape index: {0}]
  %s5 = inlined_call_operand.hbm [shape: f32[4,1,128], index: 5, kind: output, shape index: {1}]
  %6 = xla_tuple %s4, %s5
  %s7 = sld [smem:[#allocation0]]
  $region77: #{tpu_custom_call.1} parent=0
    _
  %s9 = ssub.s32 1, %s7
  %s10 = scalar_select 0, %s9, %s7
  $region1: #{tpu_custom_call.1} parent=0
    #allocation8 [shape = 'u8[512]{0}', space=smem, size = 0x200, scoped, tag = 'input window, operand 0, single buffered']
    #allocation9 [shape = 's32[2]{0}', space=sflag, size = 0x8, scoped, tag = 'scoped memory for tpu_custom_call.1']
    #allocation10 [shape = 's32[2]{0}', space=sflag, size = 0x8, scoped, tag = 'scoped memory for tpu_custom_call.1']
    #allocation11 [shape = 's32[2]{0}', space=sflag, size = 0x8, scoped, tag = 'scoped memory for tpu_custom_call.1']
    #allocation12 [shape = 'u8[32768]{0}', space=vmem, size = 0x8000, scoped, tag = 'input window, operand 1']
    #allocation13 [shape = 'u8[16384]{0}', space=vmem, size = 0x4000, scoped, tag = 'input window, operand 2']
    #allocation14 [shape = 's32[2]{0}', space=sflag, size = 0x8, scoped, tag = 'scoped memory for tpu_custom_call.1']
    #allocation15 [shape = 'u8[8192]{0}', space=vmem, size = 0x2000, scoped, tag = 'output window, operand 0']
    #allocation16 [shape = 'u8[1024]{0}', space=vmem, size = 0x400, scoped, tag = 'output window, operand 1']
    #allocation17 [shape = 's32[2]{0}', space=sflag, size = 0x8, scoped, tag = 'scoped memory for tpu_custom_call.1']
    %11 = vsyncpa [#allocation11], 0
    %12 = vsyncpa [#allocation9], 0
    %s13 = scalar_lea.sflag [#allocation9], 1
    %14 = vsyncpa %s13, 0
    %15 = vsyncpa [#allocation14], 0
    %s16 = scalar_lea.sflag [#allocation14], 1
    %17 = vsyncpa %s16, 0
    %18 = vsyncpa [#allocation10], 0
    %s19 = scalar_lea.sflag [#allocation10], 1
    %20 = vsyncpa %s19, 0
    %21 = vsyncpa [#allocation17], 0
    %s22 = scalar_lea.sflag [#allocation17], 1
    %23 = vsyncpa %s22, 0
    loop: start=0, step=1, limit=6
    $region2: #{tpu_custom_call.1} parent=1 // loop_pre_header
      _
    $region3: #{tpu_custom_call.1} parent=1 // loop_header
      %s25 = sphi 0, %s29
      %p26 = scmp.ge.s32.totalorder %s25, 6
      %s32 = sphi 0, %s44
      %s33 = sphi 0, %s40
      %s34 = sphi 0, %s32
      %s35 = sphi 0, %s33
      %s36 = sphi 0, %s34
      %s37 = sphi 0, %s35
      %s45 = sphi 0, %s45
      %s47 = sphi 0, %s45
      %s48 = sphi 0, %s47
      %s62 = sphi 0, %s48
      %s70 = sphi 0, %s72
      %s73 = sphi 0, %s70
      %s74 = sphi 0, %s73
      %s90 = sphi 0, %s74
      %s98 = sphi 0, %s100
      %s101 = sphi 0, %s98
      %s102 = sphi 0, %s101
      %s118 = sphi 0, %s102
      %s124 = sphi 0, %s126
      %s127 = sphi 0, %s124
      %s128 = sphi 0, %s127
      %s144 = sphi 0, %s128
      %s150 = sphi 0, %s152
      %s153 = sphi 0, %s150
      %s154 = sphi 0, %s153
      %s170 = sphi 0, %s154
      %s180 = sphi 0, %s182
      %s183 = sphi 0, %s180
      %s184 = sphi 0, %s183
      %s200 = sphi 0, %s184
    $region4: #{tpu_custom_call.1} parent=1 // loop_header_branch
      %28 = sbr.rel (%p26) target = $region8
    $region5: #{tpu_custom_call.1} parent=1 // loop_body
      %s30 = ssub.s32 %s25, 1
      %s31 = ssub.s32 %s25, 2
      %s38 = sadd.s32 1, %s33
      %p39 = scmp.ge.s32.totalorder %s38, 2
      %s40 = scalar_select %p39, 0, %s38
      %s41 = sadd.s32 1, %s32
      %s42 = scalar_select %p39, %s41, %s32
      %p43 = scmp.ge.s32.totalorder %s42, 2
      %s44 = scalar_select %p43, 0, %s42
      %s46 = sadd.s32 %s45, 1
      %p49 = scmp.eq.s32.totalorder %s25, 3
      %p50 = scmp.ne.s32.totalorder %s45, %s47
      %p51 = scmp.eq.s32.totalorder %s25, 0
      %p52 = por %p50, %p51
      %p53 = scmp.ne.s32.totalorder %s45, %s47
      %p54 = scmp.eq.s32.totalorder %s30, 3
      %p55 = por %p53, %p54
      %p56 = scmp.ne.s32.totalorder %s47, %s48
      %p57 = scmp.eq.s32.totalorder %s30, 0
      %p58 = por %p56, %p57
      %p59 = scmp.ne.s32.totalorder %s47, %s48
      %p60 = scmp.eq.s32.totalorder %s31, 3
      %p61 = por %p59, %p60
      %p63 = scmp.ne.s32.totalorder %s48, %s62
      %p64 = scmp.eq.s32.totalorder %s31, 0
      %p65 = por %p63, %p64
      %s66 = ssub.s32 %s32, %s44
      %s67 = ssub.s32 %s33, %s40
      %s68 = sor.u32 %s66, %s67
      %p69 = scmp.eq.s32.totalorder %s68, 0
      %s71 = sadd.s32 %s70, 1
      %s72 = scalar_select %p69, %s70, %s71
      %p75 = pneg %p69
      %p76 = scmp.eq.s32.totalorder %s25, 3
      %p77 = por %p75, %p76
      %p78 = scmp.ne.s32.totalorder %s70, %s73
      %p79 = scmp.eq.s32.totalorder %s25, 0
      %p80 = por %p78, %p79
      %p81 = scmp.ne.s32.totalorder %s70, %s73
      %p82 = scmp.eq.s32.totalorder %s30, 3
      %p83 = por %p81, %p82
      %p84 = scmp.ne.s32.totalorder %s73, %s74
      %p85 = scmp.eq.s32.totalorder %s30, 0
      %p86 = por %p84, %p85
      %p87 = scmp.ne.s32.totalorder %s73, %s74
      %p88 = scmp.eq.s32.totalorder %s31, 3
      %p89 = por %p87, %p88
      %p91 = scmp.ne.s32.totalorder %s74, %s90
      %p92 = scmp.eq.s32.totalorder %s31, 0
      %p93 = por %p91, %p92
      %s94 = ssub.s32 %s32, %s44
      %s95 = ssub.s32 %s33, %s40
      %s96 = sor.u32 %s94, %s95
      %p97 = scmp.eq.s32.totalorder %s96, 0
      %s99 = sadd.s32 %s98, 1
      %s100 = scalar_select %p97, %s98, %s99
      %p103 = pneg %p97
      %p104 = scmp.eq.s32.totalorder %s25, 3
      %p105 = por %p103, %p104
      %p106 = scmp.ne.s32.totalorder %s98, %s101
      %p107 = scmp.eq.s32.totalorder %s25, 0
      %p108 = por %p106, %p107
      %p109 = scmp.ne.s32.totalorder %s98, %s101
      %p110 = scmp.eq.s32.totalorder %s30, 3
      %p111 = por %p109, %p110
      %p112 = scmp.ne.s32.totalorder %s101, %s102
      %p113 = scmp.eq.s32.totalorder %s30, 0
      %p114 = por %p112, %p113
      %p115 = scmp.ne.s32.totalorder %s101, %s102
      %p116 = scmp.eq.s32.totalorder %s31, 3
      %p117 = por %p115, %p116
      %p119 = scmp.ne.s32.totalorder %s102, %s118
      %p120 = scmp.eq.s32.totalorder %s31, 0
      %p121 = por %p119, %p120
      %s122 = ssub.s32 %s33, %s40
      %p123 = scmp.eq.s32.totalorder %s122, 0
      %s125 = sadd.s32 %s124, 1
      %s126 = scalar_select %p123, %s124, %s125
      %p129 = pneg %p123
      %p130 = scmp.eq.s32.totalorder %s25, 3
      %p131 = por %p129, %p130
      %p132 = scmp.ne.s32.totalorder %s124, %s127
      %p133 = scmp.eq.s32.totalorder %s25, 0
      %p134 = por %p132, %p133
      %p135 = scmp.ne.s32.totalorder %s124, %s127
      %p136 = scmp.eq.s32.totalorder %s30, 3
      %p137 = por %p135, %p136
      %p138 = scmp.ne.s32.totalorder %s127, %s128
      %p139 = scmp.eq.s32.totalorder %s30, 0
      %p140 = por %p138, %p139
      %p141 = scmp.ne.s32.totalorder %s127, %s128
      %p142 = scmp.eq.s32.totalorder %s31, 3
      %p143 = por %p141, %p142
      %p145 = scmp.ne.s32.totalorder %s128, %s144
      %p146 = scmp.eq.s32.totalorder %s31, 0
      %p147 = por %p145, %p146
      %s148 = ssub.s32 %s32, %s44
      %p149 = scmp.eq.s32.totalorder %s148, 0
      %s151 = sadd.s32 %s150, 1
      %s152 = scalar_select %p149, %s150, %s151
      %p155 = pneg %p149
      %p156 = scmp.eq.s32.totalorder %s25, 3
      %p157 = por %p155, %p156
      %p158 = scmp.ne.s32.totalorder %s150, %s153
      %p159 = scmp.eq.s32.totalorder %s25, 0
      %p160 = por %p158, %p159
      %p161 = scmp.ne.s32.totalorder %s150, %s153
      %p162 = scmp.eq.s32.totalorder %s30, 3
      %p163 = por %p161, %p162
      %p164 = scmp.ne.s32.totalorder %s153, %s154
      %p165 = scmp.eq.s32.totalorder %s30, 0
      %p166 = por %p164, %p165
      %p167 = scmp.ne.s32.totalorder %s153, %s154
      %p168 = scmp.eq.s32.totalorder %s31, 3
      %p169 = por %p167, %p168
      %p171 = scmp.ne.s32.totalorder %s154, %s170
      %p172 = scmp.eq.s32.totalorder %s31, 0
      %p173 = por %p171, %p172
      %s174 = smul.u32 %s32, 2
      %s175 = sadd.s32 %s174, %s33
      %s176 = smul.u32 %s44, 2
      %s177 = sadd.s32 %s176, %s40
      %s178 = ssub.s32 %s175, %s177
      %p179 = scmp.eq.s32.totalorder %s178, 0
      %s181 = sadd.s32 %s180, 1
      %s182 = scalar_select %p179, %s180, %s181
      %p185 = pneg %p179
      %p186 = scmp.eq.s32.totalorder %s25, 3
      %p187 = por %p185, %p186
      %p188 = scmp.ne.s32.totalorder %s180, %s183
      %p189 = scmp.eq.s32.totalorder %s25, 0
      %p190 = por %p188, %p189
      %p191 = scmp.ne.s32.totalorder %s180, %s183
      %p192 = scmp.eq.s32.totalorder %s30, 3
      %p193 = por %p191, %p192
      %p194 = scmp.ne.s32.totalorder %s183, %s184
      %p195 = scmp.eq.s32.totalorder %s30, 0
      %p196 = por %p194, %p195
      %p197 = scmp.ne.s32.totalorder %s183, %s184
      %p198 = scmp.eq.s32.totalorder %s31, 3
      %p199 = por %p197, %p198
      %p201 = scmp.ne.s32.totalorder %s184, %s200
      %p202 = scmp.eq.s32.totalorder %s31, 0
      %p203 = por %p201, %p202
      %p204 = scmp.le.s32.totalorder 1, %s25
      %p205 = scmp.lt.s32.totalorder %s25, 5
      %p206 = pnand %p204, %p205
      %p207 = pneg %p206
      // Predicated region
      $region9: #{tpu_custom_call.1} parent=5 // pred_check
        _
      $region10: #{tpu_custom_call.1} parent=5 // pred_check_branch
        %209 = sbr.rel (%p206) target = $region12
      $region11: #{tpu_custom_call.1} parent=5 // pred_region
        %s210 = ssub.s32 %s25, 1
        // Predicated region
        $region13: #{tpu_custom_call.1} parent=11 // pred_check
          %p211 = pneg %p58
        $region14: #{tpu_custom_call.1} parent=11 // pred_check_branch
          %213 = sbr.rel (%p211) target = $region16
        $region15: #{tpu_custom_call.1} parent=11 // pred_region
          %s215 = ssub.s32 16, 16
          %216 = vsyncadd [#allocation11], %s215
          %219 = dma.hbm_to_smem %s0, 16, [#allocation8], [#allocation11]
        $region16: #{tpu_custom_call.1} parent=11 // pred_fallthru
          _
      $region12: #{tpu_custom_call.1} parent=5 // pred_fallthru
        _
      %p220 = scmp.lt.s32.totalorder %s25, 4
      // Predicated region
      $region17: #{tpu_custom_call.1} parent=5 // pred_check
        %p221 = pneg %p220
      $region18: #{tpu_custom_call.1} parent=5 // pred_check_branch
        %223 = sbr.rel (%p221) target = $region20
      $region19: #{tpu_custom_call.1} parent=5 // pred_region
        // Predicated region
        $region21: #{tpu_custom_call.1} parent=19 // pred_check
          %p224 = pneg %p80
        $region22: #{tpu_custom_call.1} parent=19 // pred_check_branch
          %226 = sbr.rel (%p224) target = $region24
        $region23: #{tpu_custom_call.1} parent=19 // pred_region
          %s227 = sand.u32 %s70, 1
          %s228 = scalar_lea.sflag [#allocation9], %s227
          %s229 = sand.u32 %s70, 1
          %s230 = smul.addr %s229, 32
          %s231 = scalar_lea.vmem [#allocation12], %s230
          %s233 = ssub.s32 512, 512
          %234 = vsyncadd %s228, %s233
          %s235 = smul.addr %s32, 2
          %s236 = sadd.s32 %s33, %s235
          %s237 = smul.addr %s236, 128
          %s238 = scalar_lea.hbm %s1, %s237
          %s239 = sshll.u32 %s231, 4
          %s240 = int_to_ptr.vmem [resolvable:$true] %s239
          %245 = dma.hbm_to_vmem [thread:$0]  %s238, 512, %s240, %s228, 512, 128, 8
        $region24: #{tpu_custom_call.1} parent=19 // pred_fallthru
          _
        // Predicated region
        $region25: #{tpu_custom_call.1} parent=19 // pred_check
          %p246 = pneg %p108
        $region26: #{tpu_custom_call.1} parent=19 // pred_check_branch
          %248 = sbr.rel (%p246) target = $region28
        $region27: #{tpu_custom_call.1} parent=19 // pred_region
          %s249 = sand.u32 %s98, 1
          %s250 = scalar_lea.sflag [#allocation14], %s249
          %s251 = sand.u32 %s98, 1
          %s252 = smul.addr %s251, 16
          %s253 = scalar_lea.vmem [#allocation13], %s252
          %s255 = ssub.s32 256, 256
          %256 = vsyncadd %s250, %s255
          %s257 = smul.addr %s32, 2
          %s258 = sadd.s32 %s33, %s257
          %s259 = smul.addr %s258, 128
          %s260 = scalar_lea.hbm %s2, %s259
          %s261 = sshll.u32 %s253, 4
          %s262 = int_to_ptr.vmem [resolvable:$true] %s261
          %267 = dma.hbm_to_vmem [thread:$0]  %s260, 256, %s262, %s250, 512, 128, 8
        $region28: #{tpu_custom_call.1} parent=19 // pred_fallthru
          _
        // Predicated region
        $region29: #{tpu_custom_call.1} parent=19 // pred_check
          %p268 = pneg %p134
        $region30: #{tpu_custom_call.1} parent=19 // pred_check_branch
          %270 = sbr.rel (%p268) target = $region32
        $region31: #{tpu_custom_call.1} parent=19 // pred_region
          %p271 = scmp.lt.s32.totalorder %s33, 1
          %s272 = scalar_select %p271, %s33, 1
          %s273 = scalar_lea.vmem %s3, %s272
        $region32: #{tpu_custom_call.1} parent=19 // pred_fallthru
          _
      $region20: #{tpu_custom_call.1} parent=5 // pred_fallthru
        _
      %p274 = scmp.le.s32.totalorder 1, %s25
      %p275 = scmp.lt.s32.totalorder %s25, 5
      %p276 = pnand %p274, %p275
      %p277 = pneg %p276
      // Predicated region
      $region33: #{tpu_custom_call.1} parent=5 // pred_check
        _
      $region34: #{tpu_custom_call.1} parent=5 // pred_check_branch
        %279 = sbr.rel (%p276) target = $region36
      $region35: #{tpu_custom_call.1} parent=5 // pred_region
        %s280 = ssub.s32 %s25, 1
        // Predicated region
        $region37: #{tpu_custom_call.1} parent=35 // pred_check
          %p281 = pneg %p58
        $region38: #{tpu_custom_call.1} parent=35 // pred_check_branch
          %283 = sbr.rel (%p281) target = $region40
        $region39: #{tpu_custom_call.1} parent=35 // pred_region
          %284 = dma.done [#allocation11], 16
        $region40: #{tpu_custom_call.1} parent=35 // pred_fallthru
          _
        %s285 = sand.u32 %s73, 1
        %s286 = scalar_lea.sflag [#allocation9], %s285
        %s287 = sand.u32 %s73, 1
        %s288 = smul.addr %s287, 32
        %s289 = scalar_lea.vmem [#allocation12], %s288
        // Predicated region
        $region41: #{tpu_custom_call.1} parent=35 // pred_check
          %p290 = pneg %p86
        $region42: #{tpu_custom_call.1} parent=35 // pred_check_branch
          %292 = sbr.rel (%p290) target = $region44
        $region43: #{tpu_custom_call.1} parent=35 // pred_region
          %293 = dma.done %s286, 512
        $region44: #{tpu_custom_call.1} parent=35 // pred_fallthru
          _
        %s294 = sand.u32 %s101, 1
        %s295 = scalar_lea.sflag [#allocation14], %s294
        %s296 = sand.u32 %s101, 1
        %s297 = smul.addr %s296, 16
        %s298 = scalar_lea.vmem [#allocation13], %s297
        // Predicated region
        $region45: #{tpu_custom_call.1} parent=35 // pred_check
          %p299 = pneg %p114
        $region46: #{tpu_custom_call.1} parent=35 // pred_check_branch
          %301 = sbr.rel (%p299) target = $region48
        $region47: #{tpu_custom_call.1} parent=35 // pred_region
          %302 = dma.done %s295, 256
        $region48: #{tpu_custom_call.1} parent=35 // pred_fallthru
          _
        %303 = sfence
        %p304 = pneg %p58
        %p305 = pneg %p55
        %s306 = sand.u32 %s73, 1
        %s307 = scalar_lea.sflag [#allocation9], %s306
        %s308 = sand.u32 %s73, 1
        %s309 = smul.addr %s308, 32
        %s310 = scalar_lea.vmem [#allocation12], %s309
        %p311 = pneg %p86
        %p312 = pneg %p83
        %s313 = sand.u32 %s101, 1
        %s314 = scalar_lea.sflag [#allocation14], %s313
        %s315 = sand.u32 %s101, 1
        %s316 = smul.addr %s315, 16
        %s317 = scalar_lea.vmem [#allocation13], %s316
        %p318 = pneg %p114
        %p319 = pneg %p111
        %p320 = scmp.lt.s32.totalorder %s35, 1
        %s321 = scalar_select %p320, %s35, 1
        %s322 = scalar_lea.vmem %s3, %s321
        %p323 = pneg %p140
        %p324 = pneg %p137
        %p325 = pneg %p166
        %p326 = pneg %p163
        %s327 = sand.u32 %s153, 1
        %s328 = scalar_lea.sflag [#allocation10], %s327
        %s329 = sand.u32 %s153, 1
        %s330 = smul.addr %s329, 8
        %s331 = scalar_lea.vmem [#allocation15], %s330
        %p332 = pneg %p196
        %p333 = pneg %p193
        %s334 = sand.u32 %s183, 1
        %s335 = scalar_lea.sflag [#allocation17], %s334
        %s336 = sand.u32 %s183, 1
        %s337 = scalar_lea.vmem [#allocation16], %s336
        %p338 = scmp.lt.s32.totalorder %s35, 1
        %s339 = scalar_select %p338, %s35, 1
        %s340 = scalar_lea.vmem %s3, %s339
        %s341 = smul.u32 %s34, 2
        %s342 = sadd.s32 %s341, %s35
        %s343 = sld [smem:[#allocation8]]
        %s344 = sld [smem:[#allocation8 + $0x1]]
        %s345 = sld [smem:[#allocation8 + $0x2]]
        %s346 = sld [smem:[#allocation8 + $0x3]]
        %p347 = scmp.eq.s32.totalorder %s35, 0
        // Predicated region
        $region49: #{tpu_custom_call.1} parent=35 // pred_check
          %p348 = pneg %p347
        $region50: #{tpu_custom_call.1} parent=35 // pred_check_branch
          %350 = sbr.rel (%p348) target = $region52
        $region51: #{tpu_custom_call.1} parent=35 // pred_region
          %vm351 = vcmask 7168
          %352 = vst.msk [vmem:[#allocation2] sm:$0xff] %vm351, -1e+30
          %353 = vst.msk [vmem:[#allocation2 + $0x8] sm:$0xff] %vm351, -1e+30
          %354 = vst.msk [vmem:[#allocation3] sm:$0xff] %vm351, 0.0
          %355 = vst.msk [vmem:[#allocation3 + $0x8] sm:$0xff] %vm351, 0.0
          %356 = vst.msk [vmem:[#allocation4] sm:$0xff] %vm351, 0.0
          %357 = vst.msk [vmem:[#allocation4 + $0x8] sm:$0xff] %vm351, 0.0
          %358 = vst.msk [vmem:[#allocation5] sm:$0xff] %vm351, 0.0
          %359 = vst.msk [vmem:[#allocation5 + $0x8] sm:$0xff] %vm351, 0.0
          %360 = vst.msk [vmem:[#allocation6] sm:$0xff] %vm351, -1e+30
          %361 = vst.msk [vmem:[#allocation6 + $0x8] sm:$0xff] %vm351, -1e+30
          %362 = vst.msk [vmem:[#allocation6 + $0x10] sm:$0xff] %vm351, -1e+30
          %363 = vst.msk [vmem:[#allocation6 + $0x18] sm:$0xff] %vm351, -1e+30
          %364 = vst.msk [vmem:[#allocation7] sm:$0xff] %vm351, 0.0
          %365 = vst.msk [vmem:[#allocation7 + $0x8] sm:$0xff] %vm351, 0.0
          %366 = vst.msk [vmem:[#allocation7 + $0x10] sm:$0xff] %vm351, 0.0
          %367 = vst.msk [vmem:[#allocation7 + $0x18] sm:$0xff] %vm351, 0.0
        $region52: #{tpu_custom_call.1} parent=35 // pred_fallthru
          _
        %v368 = vld [vmem:[%s298] sm:$0xff]
        %v369 = vld [vmem:[%s298 + $0x8] sm:$0xff]
        %v370 = vld [vmem:[%s340] sm:$0x1]
        %v372 = vlaneseq
        %v373 = vshrl.u32 %v372, 7
        %v374 = vsub.s32 0, %v373
        %v375 = vrot.slane %v370, %v374
        %v377 = vsub.f32 %v368, %v375
        %v378 = vsub.f32 %v369, %v375
        %v379 = vstv %s344
        %v380 = vmul.f32 %v377, %v379
        %v381 = vmul.f32 %v378, %v379
        %v382 = vld [vmem:[#allocation2] sm:$0xff]
        %v383 = vld [vmem:[#allocation2 + $0x8] sm:$0xff]
        %384 = vmax.xlane.f32.xlu0 %v380
        %v385 = vpop.xlane.xlu0 %384
        %386 = vmax.xlane.f32.xlu0 %v381
        %v387 = vpop.xlane.xlu0 %386
        %v388 = vmax.f32 %v382, %v385
        %v389 = vmax.f32 %v383, %v387
        %v390 = vsub.f32 %v382, %v388
        %v391 = vsub.f32 %v383, %v389
        %v392 = vmul.f32 %v390, 1.442695
        %v393 = vpow.pop %v392
        %v394 = vmul.f32 %v391, 1.442695
        %v395 = vpow.pop %v394
        %397 = vset.pattern.permute.xlu0 0
        %398 = vperm.xlu0 %397, %v388
        %v399 = vpop.permute.xlu0 %398
        %402 = vset.pattern.permute.xlu0 0
        %403 = vperm.xlu0 %402, %v389
        %v404 = vpop.permute.xlu0 %403
        %v406 = vsub.f32 %v380, %v399
        %v407 = vsub.f32 %v381, %v404
        %v408 = vmul.f32 %v406, 1.442695
        %v409 = vpow.pop %v408
        %v410 = vmul.f32 %v407, 1.442695
        %v411 = vpow.pop %v410
        %vm412 = vcmask 7168
        %413 = vst.msk [vmem:[#allocation2] sm:$0xff] %vm412, %v388
        %414 = vst.msk [vmem:[#allocation2 + $0x8] sm:$0xff] %vm412, %v389
        %v415 = vld [vmem:[#allocation3] sm:$0xff]
        %v416 = vld [vmem:[#allocation3 + $0x8] sm:$0xff]
        %v417 = vmul.f32 %v393, %v415
        %v418 = vmul.f32 %v395, %v416
        %419 = vadd.xlane.f32.xlu0 %v409
        %v420 = vpop.xlane.xlu0 %419
        %421 = vadd.xlane.f32.xlu0 %v411
        %v422 = vpop.xlane.xlu0 %421
        %v423 = vadd.f32 %v417, %v420
        %v424 = vadd.f32 %v418, %v422
        %425 = vst.msk [vmem:[#allocation3] sm:$0xff] %vm412, %v423
        %426 = vst.msk [vmem:[#allocation3 + $0x8] sm:$0xff] %vm412, %v424
        %v427 = vld [vmem:[%s289] sm:$0xff]
        %v428 = vstv %s343
        %v429 = vmul.f32 %v427, %v428
        %v430 = vld [vmem:[#allocation6] sm:$0xff]
        %431 = vmax.xlane.f32.xlu0 %v429
        %v432 = vpop.xlane.xlu0 %431
        %v433 = vmax.f32 %v430, %v432
        %v434 = vsub.f32 %v430, %v433
        %v435 = vmul.f32 %v434, 1.442695
        %v436 = vpow.pop %v435
        %v437 = vld [vmem:[#allocation7] sm:$0xff]
        %v438 = vmul.f32 %v436, %v437
        %440 = vset.pattern.permute.xlu0 0
        %441 = vperm.xlu0 %440, %v433
        %v442 = vpop.permute.xlu0 %441
        %v444 = vsub.f32 %v429, %v442
        %v445 = vmul.f32 %v444, 1.442695
        %v446 = vpow.pop %v445
        %447 = vadd.xlane.f32.xlu0 %v446
        %v448 = vpop.xlane.xlu0 %447
        %v449 = vadd.f32 %v438, %v448
        %450 = vst.msk [vmem:[#allocation7] sm:$0xff] %vm412, %v449
        %451 = vst.msk [vmem:[#allocation6] sm:$0xff] %vm412, %v433
        %v452 = vmul.f32 %v409, %v429
        %v453 = vmul.f32 %v411, %v429
        %454 = vadd.xlane.f32.xlu0 %v452
        %v455 = vpop.xlane.xlu0 %454
        %456 = vadd.xlane.f32.xlu0 %v453
        %v457 = vpop.xlane.xlu0 %456
        %v458 = vadd.f32 %v455, 0.0
        %v459 = vadd.f32 %v457, 0.0
        %v460 = vsel 1, %v455, 0.0
        %v461 = vsel 0, %v457, 0.0
        %v462 = vadd.f32 %v460, 0.0
        %v463 = vadd.f32 %v461, 0.0
        %s464 = scalar_lea.vmem %s289, 8 [#allocation12]
        %v465 = vld [vmem:[%s464] sm:$0xff]
        %v466 = vmul.f32 %v465, %v428
        %s467 = scalar_lea.vmem [#allocation6], 8
        %v468 = vld [vmem:[%s467] sm:$0xff]
        %469 = vmax.xlane.f32.xlu0 %v466
        %v470 = vpop.xlane.xlu0 %469
        %v471 = vmax.f32 %v468, %v470
        %v472 = vsub.f32 %v468, %v471
        %v473 = vmul.f32 %v472, 1.442695
        %v474 = vpow.pop %v473
        %s475 = scalar_lea.vmem [#allocation7], 8
        %v476 = vld [vmem:[%s475] sm:$0xff]
        %v477 = vmul.f32 %v474, %v476
        %479 = vset.pattern.permute.xlu0 0
        %480 = vperm.xlu0 %479, %v471
        %v481 = vpop.permute.xlu0 %480
        %v483 = vsub.f32 %v466, %v481
        %v484 = vmul.f32 %v483, 1.442695
        %v485 = vpow.pop %v484
        %486 = vadd.xlane.f32.xlu0 %v485
        %v487 = vpop.xlane.xlu0 %486
        %v488 = vadd.f32 %v477, %v487
        %489 = vst.msk [vmem:[%s475] sm:$0xff] %vm412, %v488
        %490 = vst.msk [vmem:[%s467] sm:$0xff] %vm412, %v471
        %v491 = vmul.f32 %v409, %v466
        %v492 = vmul.f32 %v411, %v466
        %493 = vadd.xlane.f32.xlu0 %v491
        %v494 = vpop.xlane.xlu0 %493
        %495 = vadd.xlane.f32.xlu0 %v492
        %v496 = vpop.xlane.xlu0 %495
        %v497 = vadd.f32 %v458, %v494
        %v498 = vadd.f32 %v459, %v496
        %v499 = vsel 0, %v494, 0.0
        %v500 = vsel 1, %v496, 0.0
        %v501 = vadd.f32 %v462, %v499
        %v502 = vadd.f32 %v463, %v500
        %s503 = scalar_lea.vmem %s289, 16 [#allocation12]
        %v504 = vld [vmem:[%s503] sm:$0xff]
        %v505 = vmul.f32 %v504, %v428
        %s506 = scalar_lea.vmem [#allocation6], 16
        %v507 = vld [vmem:[%s506] sm:$0xff]
        %508 = vmax.xlane.f32.xlu0 %v505
        %v509 = vpop.xlane.xlu0 %508
        %v510 = vmax.f32 %v507, %v509
        %v511 = vsub.f32 %v507, %v510
        %v512 = vmul.f32 %v511, 1.442695
        %v513 = vpow.pop %v512
        %s514 = scalar_lea.vmem [#allocation7], 16
        %v515 = vld [vmem:[%s514] sm:$0xff]
        %v516 = vmul.f32 %v513, %v515
        %518 = vset.pattern.permute.xlu0 0
        %519 = vperm.xlu0 %518, %v510
        %v520 = vpop.permute.xlu0 %519
        %v522 = vsub.f32 %v505, %v520
        %v523 = vmul.f32 %v522, 1.442695
        %v524 = vpow.pop %v523
        %525 = vadd.xlane.f32.xlu0 %v524
        %v526 = vpop.xlane.xlu0 %525
        %v527 = vadd.f32 %v516, %v526
        %528 = vst.msk [vmem:[%s514] sm:$0xff] %vm412, %v527
        %529 = vst.msk [vmem:[%s506] sm:$0xff] %vm412, %v510
        %v530 = vmul.f32 %v409, %v505
        %v531 = vmul.f32 %v411, %v505
        %532 = vadd.xlane.f32.xlu0 %v530
        %v533 = vpop.xlane.xlu0 %532
        %534 = vadd.xlane.f32.xlu0 %v531
        %v535 = vpop.xlane.xlu0 %534
        %v536 = vadd.f32 %v497, %v533
        %v537 = vadd.f32 %v498, %v535
        %s538 = scalar_lea.vmem %s289, 24 [#allocation12]
        %v539 = vld [vmem:[%s538] sm:$0xff]
        %v540 = vmul.f32 %v539, %v428
        %s541 = scalar_lea.vmem [#allocation6], 24
        %v542 = vld [vmem:[%s541] sm:$0xff]
        %543 = vmax.xlane.f32.xlu0 %v540
        %v544 = vpop.xlane.xlu0 %543
        %v545 = vmax.f32 %v542, %v544
        %v546 = vsub.f32 %v542, %v545
        %v547 = vmul.f32 %v546, 1.442695
        %v548 = vpow.pop %v547
        %s549 = scalar_lea.vmem [#allocation7], 24
        %v550 = vld [vmem:[%s549] sm:$0xff]
        %v551 = vmul.f32 %v548, %v550
        %553 = vset.pattern.permute.xlu0 0
        %554 = vperm.xlu0 %553, %v545
        %v555 = vpop.permute.xlu0 %554
        %v557 = vsub.f32 %v540, %v555
        %v558 = vmul.f32 %v557, 1.442695
        %v559 = vpow.pop %v558
        %560 = vadd.xlane.f32.xlu0 %v559
        %v561 = vpop.xlane.xlu0 %560
        %v562 = vadd.f32 %v551, %v561
        %563 = vst.msk [vmem:[%s549] sm:$0xff] %vm412, %v562
        %564 = vst.msk [vmem:[%s541] sm:$0xff] %vm412, %v545
        %v565 = vmul.f32 %v409, %v540
        %v566 = vmul.f32 %v411, %v540
        %567 = vadd.xlane.f32.xlu0 %v565
        %v568 = vpop.xlane.xlu0 %567
        %569 = vadd.xlane.f32.xlu0 %v566
        %v570 = vpop.xlane.xlu0 %569
        %v571 = vadd.f32 %v536, %v568
        %v572 = vadd.f32 %v537, %v570
        %v573 = vld [vmem:[#allocation4] sm:$0xff]
        %v574 = vld [vmem:[#allocation4 + $0x8] sm:$0xff]
        %v575 = vmul.f32 %v393, %v573
        %v576 = vmul.f32 %v395, %v574
        %v577 = vadd.f32 %v575, %v571
        %v578 = vadd.f32 %v576, %v572
        %579 = vst.msk [vmem:[#allocation4] sm:$0xff] %vm412, %v577
        %580 = vst.msk [vmem:[#allocation4 + $0x8] sm:$0xff] %vm412, %v578
        %v581 = vld [vmem:[#allocation5] sm:$0xff]
        %v582 = vld [vmem:[#allocation5 + $0x8] sm:$0xff]
        %v583 = vmul.f32 %v393, %v581
        %v584 = vmul.f32 %v395, %v582
        %v585 = vadd.f32 %v583, %v501
        %v586 = vadd.f32 %v584, %v502
        %587 = vst.msk [vmem:[#allocation5] sm:$0xff] %vm412, %v585
        %588 = vst.msk [vmem:[#allocation5 + $0x8] sm:$0xff] %vm412, %v586
        %v589 = vadd.f32 %v368, %v369
        %v590 = vrot.slane %v589, 4
        %v591 = vadd.f32 %v589, %v590
        %v592 = vrot.slane %v591, 2
        %v593 = vadd.f32 %v591, %v592
        %v594 = vrot.slane %v593, 1
        %v595 = vadd.f32 %v593, %v594
        %596 = vst [vmem:[%s337] sm:$0x1] %v595
        %p597 = scmp.eq.s32.totalorder %s35, 1
        // Predicated region
        $region53: #{tpu_custom_call.1} parent=35 // pred_check
          %p598 = pneg %p597
        $region54: #{tpu_custom_call.1} parent=35 // pred_check_branch
          %600 = sbr.rel (%p598) target = $region56
        $region55: #{tpu_custom_call.1} parent=35 // pred_region
          %v601 = vld [vmem:[#allocation6] sm:$0xff]
          %v602 = vld [vmem:[#allocation6 + $0x8] sm:$0xff]
          %v603 = vld [vmem:[#allocation6 + $0x10] sm:$0xff]
          %v604 = vld [vmem:[#allocation6 + $0x18] sm:$0xff]
          %v605 = vld [vmem:[#allocation7] sm:$0xff]
          %v606 = vld [vmem:[#allocation7 + $0x8] sm:$0xff]
          %v607 = vld [vmem:[#allocation7 + $0x10] sm:$0xff]
          %v608 = vld [vmem:[#allocation7 + $0x18] sm:$0xff]
          %v609 = vlog2.pop %v605
          %v610 = vmul.f32 %v609, 0.6931472
          %v611 = vlog2.pop %v606
          %v612 = vmul.f32 %v611, 0.6931472
          %v613 = vlog2.pop %v607
          %v614 = vmul.f32 %v613, 0.6931472
          %v615 = vlog2.pop %v608
          %v616 = vmul.f32 %v615, 0.6931472
          %v617 = vadd.f32 %v601, %v610
          %v618 = vadd.f32 %v602, %v612
          %v619 = vadd.f32 %v603, %v614
          %v620 = vadd.f32 %v604, %v616
          %v621 = vsel %vm412, %v617, 0.0
          %v622 = vsel %vm412, %v618, 0.0
          %v623 = vadd.f32 %v621, %v622
          %v624 = vsel %vm412, %v619, 0.0
          %v625 = vadd.f32 %v623, %v624
          %v626 = vsel %vm412, %v620, 0.0
          %v627 = vadd.f32 %v625, %v626
          %v628 = vld [vmem:[#allocation4] sm:$0xff]
          %v629 = vld [vmem:[#allocation4 + $0x8] sm:$0xff]
          %v630 = vld [vmem:[#allocation5] sm:$0xff]
          %v631 = vld [vmem:[#allocation5 + $0x8] sm:$0xff]
          %v632 = vsub.f32 %v628, %v630
          %v633 = vsub.f32 %v629, %v631
          %v634 = vld [vmem:[#allocation3] sm:$0xff]
          %v635 = vld [vmem:[#allocation3 + $0x8] sm:$0xff]
          %v636 = vrcp.pop %v634
          %v637 = vmul.f32 %v632, %v636
          %v638 = vrcp.pop %v635
          %v639 = vmul.f32 %v633, %v638
          %v640 = vmul.f32 %v627, 2.0
          %v641 = vsub.f32 %v640, %v617
          %v642 = vsub.f32 %v641, %v618
          %v643 = vsub.f32 %v642, %v637
          %v644 = vsub.f32 %v643, %v639
          %s645 = smul.u32 %s34, 8
          %v646 = vlaneseq
          %v647 = vshrl.u32 %v646, 7
          %v648 = vstv %s645
          %v649 = vadd.s32 %v648, %v647
          %vm650 = vcmp.lt.s32.totalorder %v649, 12
          %v651 = vsel %vm650, %v644, 0.0
          %v652 = vsel %vm412, %v651, 0.0
          %653 = vadd.xlane.f32.xlu0 %v652
          %v654 = vpop.xlane.xlu0 %653
          %v655 = vrot.slane %v654, 4
          %v656 = vadd.f32 %v654, %v655
          %v657 = vrot.slane %v656, 2
          %v658 = vadd.f32 %v656, %v657
          %v659 = vrot.slane %v658, 1
          %v660 = vadd.f32 %v658, %v659
          %s661 = vtos %v660
          %s662 = smul.f32 %s661, %s345
          %s663 = smul.f32 %s662, %s346
          %v664 = vstv %s663
          %665 = vst [vmem:[%s331] sm:$0xff] %v664
        $region56: #{tpu_custom_call.1} parent=35 // pred_fallthru
          _
        %s666 = sand.u32 %s153, 1
        %s667 = scalar_lea.sflag [#allocation10], %s666
        %s668 = sand.u32 %s153, 1
        %s669 = smul.addr %s668, 8
        %s670 = scalar_lea.vmem [#allocation15], %s669
        %s671 = sand.u32 %s183, 1
        %s672 = scalar_lea.sflag [#allocation17], %s671
        %s673 = sand.u32 %s183, 1
        %s674 = scalar_lea.vmem [#allocation16], %s673
        // Predicated region
        $region57: #{tpu_custom_call.1} parent=35 // pred_check
          %p675 = pneg %p163
        $region58: #{tpu_custom_call.1} parent=35 // pred_check_branch
          %677 = sbr.rel (%p675) target = $region60
        $region59: #{tpu_custom_call.1} parent=35 // pred_region
          %s679 = ssub.s32 128, 128
          %680 = vsyncadd %s667, %s679
          %s681 = smul.addr %s34, 128
          %s682 = scalar_lea.hbm %s4, %s681
          %s684 = sshll.u32 %s670, 4
          %s685 = int_to_ptr.vmem [resolvable:$true] %s684
          %687 = dma.vmem_to_hbm [thread:$0]  %s685, 128, %s682, %s667
        $region60: #{tpu_custom_call.1} parent=35 // pred_fallthru
          _
        // Predicated region
        $region61: #{tpu_custom_call.1} parent=35 // pred_check
          %p688 = pneg %p193
        $region62: #{tpu_custom_call.1} parent=35 // pred_check_branch
          %690 = sbr.rel (%p688) target = $region64
        $region63: #{tpu_custom_call.1} parent=35 // pred_region
          %s691 = smul.u32 %s34, 2
          %s692 = sadd.s32 %s691, %s35
          %s694 = ssub.s32 16, 16
          %695 = vsyncadd %s672, %s694
          %s696 = smul.addr %s692, 16
          %s697 = scalar_lea.hbm %s5, %s696
          %s699 = sshll.u32 %s674, 4
          %s700 = int_to_ptr.vmem [resolvable:$true] %s699
          %702 = dma.vmem_to_hbm [thread:$0]  %s700, 16, %s697, %s672
        $region64: #{tpu_custom_call.1} parent=35 // pred_fallthru
          _
      $region36: #{tpu_custom_call.1} parent=5 // pred_fallthru
        _
      %p703 = scmp.le.s32.totalorder 2, %s25
      // Predicated region
      $region65: #{tpu_custom_call.1} parent=5 // pred_check
        %p704 = pneg %p703
      $region66: #{tpu_custom_call.1} parent=5 // pred_check_branch
        %706 = sbr.rel (%p704) target = $region68
      $region67: #{tpu_custom_call.1} parent=5 // pred_region
        %s707 = ssub.s32 %s25, 2
        // Predicated region
        $region69: #{tpu_custom_call.1} parent=67 // pred_check
          %p708 = pneg %p169
        $region70: #{tpu_custom_call.1} parent=67 // pred_check_branch
          %710 = sbr.rel (%p708) target = $region72
        $region71: #{tpu_custom_call.1} parent=67 // pred_region
          %s711 = sand.u32 %s154, 1
          %s712 = scalar_lea.sflag [#allocation10], %s711
          %s713 = sand.u32 %s154, 1
          %s714 = smul.addr %s713, 8
          %s715 = scalar_lea.vmem [#allocation15], %s714
          %716 = dma.done %s712, 128
        $region72: #{tpu_custom_call.1} parent=67 // pred_fallthru
          _
        // Predicated region
        $region73: #{tpu_custom_call.1} parent=67 // pred_check
          %p717 = pneg %p199
        $region74: #{tpu_custom_call.1} parent=67 // pred_check_branch
          %719 = sbr.rel (%p717) target = $region76
        $region75: #{tpu_custom_call.1} parent=67 // pred_region
          %s720 = sand.u32 %s184, 1
          %s721 = scalar_lea.sflag [#allocation17], %s720
          %s722 = sand.u32 %s184, 1
          %s723 = scalar_lea.vmem [#allocation16], %s722
          %724 = dma.done %s721, 16
        $region76: #{tpu_custom_call.1} parent=67 // pred_fallthru
          _
      $region68: #{tpu_custom_call.1} parent=5 // pred_fallthru
        _
    $region6: #{tpu_custom_call.1} parent=1 // loop_footer
      %s29 = sadd.s32 1, %s25
    $region7: #{tpu_custom_call.1} parent=1 // loop_footer_branch
      %24 = sbr.rel target = $region3
    $region8: #{tpu_custom_call.1} parent=1 // loop_exit
      _
    %725 = vsyncpa [#allocation9], 1
    %s726 = scalar_lea.sflag [#allocation9], 1
    %727 = vsyncpa %s726, 1
    %728 = vsyncpa [#allocation14], 1
    %s729 = scalar_lea.sflag [#allocation14], 1
    %730 = vsyncpa %s729, 1
    %731 = vsyncpa [#allocation10], 1
    %s732 = scalar_lea.sflag [#allocation10], 1
    %733 = vsyncpa %s732, 1
    %734 = vsyncpa [#allocation17], 1
    %s735 = scalar_lea.sflag [#allocation17], 1
    %736 = vsyncpa %s735, 1
    %737 = vsyncpa [#allocation11], 1
    %s738 = scalar_lea.sflag [#allocation11], 1
    %739 = vsyncpa %s738, 1

</llo_original>
